<compile_context>
chip_gen: v7x
topology: tpu7x:2x2x1
jax: 0.10.0
libtpu: 0.0.40
codegen_flags: <defaults>
</compile_context>

<pallas_src>
import functools
import math

import jax
import jax.numpy as jnp
from jax.experimental import pallas as pl
from jax.experimental.pallas import tpu as pltpu


# --------------------------- in-kernel helpers -------------------------------

def _layernorm_f32(x, g, b, eps):
    mu = jnp.mean(x, axis=-1, keepdims=True)
    xc = x - mu
    var = jnp.mean(xc * xc, axis=-1, keepdims=True)
    return xc * jax.lax.rsqrt(var + eps) * g + b


def _gelu_tanh(x):
    # TODO(synk): HF bert-base default is exact erf GELU; tanh approximation kept here.
    return 0.5 * x * (1.0 + jnp.tanh(0.7978845608028654 * (x + 0.044715 * x * x * x)))


# --------------------------- fused Pallas kernel ------------------------------

def _bert_ner_kernel(x_ref, mask_ref, emb_g_ref, emb_b_ref,
                     qkv_w_ref, qkv_b_ref, o_w_ref, o_b_ref,
                     ln1_g_ref, ln1_b_ref, ff1_w_ref, ff1_b_ref,
                     ff2_w_ref, ff2_b_ref, ln2_g_ref, ln2_b_ref,
                     cls_w_ref, cls_b_ref, out_ref, *, layers, nh, dh, eps):
    H = nh * dh
    BS = x_ref.shape[0]                                        # all batch*seq token rows

    # ---- embedding LayerNorm (no residual) ----
    x = _layernorm_f32(x_ref[...].astype(jnp.float32), emb_g_ref[...], emb_b_ref[...], eps)

    # Additive attention mask (block-diagonal across batch + key padding), replicated once
    # per head along the sublane axis.  Hoisted: constant across layers.
    mask = mask_ref[...]                                       # (BS, BS) f32
    mask_heads = jnp.concatenate([mask] * nh, axis=0)          # (nh*BS, BS)

    # Per-head lane masks: select the dh lanes owned by head h.  Hoisted.
    lane = jax.lax.broadcasted_iota(jnp.int32, (1, H), 1)
    head_lane = [((lane >= h * dh) & (lane < (h + 1) * dh)).astype(jnp.float32)
                 for h in range(nh)]

    for l in range(layers):                                    # static unroll over stacked weights
        x_bf = x.astype(jnp.bfloat16)

        # ---- fused Q/K/V projection over ALL token rows (one MXU pass) ----
        # 1/sqrt(dh) scale already folded into the Q third of qkv_w at init.
        qkv = jnp.dot(x_bf, qkv_w_ref[l],
                      preferred_element_type=jnp.float32) + qkv_b_ref[l]      # (BS, 3H) f32
        q, k, v = qkv[:, :H], qkv[:, H:2 * H], qkv[:, 2 * H:]
        k_bf = k.astype(jnp.bfloat16)
        v_bf = v.astype(jnp.bfloat16)

        # ---- attention: heads packed along sublanes, batch handled by block-diag mask ----
        # Row h*BS+i of q_stack holds q[i] restricted (via lane mask) to head-h lanes, so a
        # single (nh*BS, H) x (H, BS) contraction yields every head's score matrix at once.
        q_stack = jnp.concatenate([q * head_lane[h] for h in range(nh)], axis=0)
        s = jax.lax.dot_general(q_stack.astype(jnp.bfloat16), k_bf,
                                (((1,), (1,)), ((), ())),
                                preferred_element_type=jnp.float32)           # (nh*BS, BS)
        s = s + mask_heads
        s_max = jnp.max(s, axis=-1, keepdims=True)
        p = jnp.exp(s - s_max)
        p = p * pl.reciprocal(jnp.sum(p, axis=-1, keepdims=True), approx=True)  # EUP vrcp
        c = jnp.dot(p.astype(jnp.bfloat16), v_bf,
                    preferred_element_type=jnp.float32)                       # (nh*BS, H)
        # Scatter each head's block back onto its own lanes and sum -> (BS, H) context.
        ctx = head_lane[0] * c[0:BS]
        for h in range(1, nh):
            ctx = ctx + head_lane[h] * c[h * BS:(h + 1) * BS]

        # ---- attention output projection + residual + LayerNorm 1 ----
        attn = jnp.dot(ctx.astype(jnp.bfloat16), o_w_ref[l],
                       preferred_element_type=jnp.float32) + o_b_ref[l]
        x1 = _layernorm_f32(attn + x, ln1_g_ref[l], ln1_b_ref[l], eps)

        # ---- feed-forward (GELU) + residual + LayerNorm 2 ----
        h1 = jnp.dot(x1.astype(jnp.bfloat16), ff1_w_ref[l],
                     preferred_element_type=jnp.float32) + ff1_b_ref[l]
        h1 = _gelu_tanh(h1)
        ff = jnp.dot(h1.astype(jnp.bfloat16), ff2_w_ref[l],
                     preferred_element_type=jnp.float32) + ff2_b_ref[l]
        x = _layernorm_f32(ff + x1, ln2_g_ref[l], ln2_b_ref[l], eps)

    # ---- NER classifier head (weight padded to 128 lanes -> lane-dense store) ----
    y = jnp.dot(x.astype(jnp.bfloat16), cls_w_ref[...],
                preferred_element_type=jnp.float32) + cls_b_ref[...]
    out_ref[...] = y.astype(out_ref.dtype)


# --------------------------- wrapper -------------------------------------------

def bert_ner_fused(x_emb, add_mask, p):
    cfg = p["cfg"]
    BS, H = x_emb.shape
    lane_pad = p["cls_w_pad"].shape[1]
    args = (x_emb, add_mask, p["emb_ln_g"], p["emb_ln_b"],
            p["qkv_w"], p["qkv_b"], p["o_w"], p["o_b"],
            p["ln1_g"], p["ln1_b"], p["ff1_w"], p["ff1_b"],
            p["ff2_w"], p["ff2_b"], p["ln2_g"], p["ln2_b"],
            p["cls_w_pad"], p["cls_b_pad"])
    vmem = pl.BlockSpec(memory_space=pltpu.MemorySpace.VMEM)   # whole array resident in VMEM
    kernel = functools.partial(_bert_ner_kernel, layers=cfg["layers"],
                               nh=cfg["heads"], dh=H // cfg["heads"], eps=1e-12)
    # TODO(synk): at real BERT-base dims (H=768, inter=3072, S>=128) full-layer-resident weights
    # + an unblocked SxS attention exceed v7x's 64 MiB VMEM; re-tile over KV blocks / per-layer
    # grid axis and re-budget vmem_limit_bytes before scaling beyond toy shapes.
    return pl.pallas_call(
        kernel,
        out_shape=jax.ShapeDtypeStruct((BS, lane_pad), jnp.float32),
        in_specs=[vmem] * len(args),
        out_specs=vmem,
        compiler_params=pltpu.CompilerParams(vmem_limit_bytes=32 * 1024 * 1024),
    )(*args)


# --------------------------- Model (glue) --------------------------------------

def init_params(key, *, vocab=128, hidden=32, layers=2, heads=4, inter=64,
                max_pos=32, type_vocab=2, ner_cnt=7, lane_pad=128):
    dh = hidden // heads
    scale = 1.0 / math.sqrt(dh)
    keys = iter(jax.random.split(key, 64))

    def nrm(shape, std=0.02):
        return jax.random.normal(next(keys), shape, jnp.float32) * std

    p = {
        "cfg": dict(hidden=hidden, heads=heads, layers=layers, ner_cnt=ner_cnt),
        "word_emb": nrm((vocab, hidden)),
        "pos_emb": nrm((max_pos, hidden)),
        "type_emb": nrm((type_vocab, hidden)),
        "emb_ln_g": jnp.ones((1, hidden), jnp.float32),
        "emb_ln_b": jnp.zeros((1, hidden), jnp.float32),
    }
    qkv_ws, o_ws, ff1_ws, ff2_ws = [], [], [], []
    for _ in range(layers):
        q_w, k_w, v_w = nrm((hidden, hidden)), nrm((hidden, hidden)), nrm((hidden, hidden))
        # fused QKV weight; 1/sqrt(dh) attention scale folded into the Q third.
        qkv_ws.append(jnp.concatenate([q_w * scale, k_w, v_w], axis=1))
        o_ws.append(nrm((hidden, hidden)))
        ff1_ws.append(nrm((hidden, inter)))
        ff2_ws.append(nrm((inter, hidden)))
    # Per-layer weights stacked along a leading L axis; matmul weights pre-cast to bf16.
    p.update({
        "qkv_w": jnp.stack(qkv_ws).astype(jnp.bfloat16),              # (L, H, 3H)
        "qkv_b": jnp.zeros((layers, 1, 3 * hidden), jnp.float32),
        "o_w":   jnp.stack(o_ws).astype(jnp.bfloat16),                # (L, H, H)
        "o_b":   jnp.zeros((layers, 1, hidden), jnp.float32),
        "ln1_g": jnp.ones((layers, 1, hidden), jnp.float32),
        "ln1_b": jnp.zeros((layers, 1, hidden), jnp.float32),
        "ff1_w": jnp.stack(ff1_ws).astype(jnp.bfloat16),              # (L, H, I)
        "ff1_b": jnp.zeros((layers, 1, inter), jnp.float32),
        "ff2_w": jnp.stack(ff2_ws).astype(jnp.bfloat16),              # (L, I, H)
        "ff2_b": jnp.zeros((layers, 1, hidden), jnp.float32),
        "ln2_g": jnp.ones((layers, 1, hidden), jnp.float32),
        "ln2_b": jnp.zeros((layers, 1, hidden), jnp.float32),
    })
    # ner_cls: xavier_uniform_ weight, zero bias (matches BERT_NER.init_weights).
    # Padded to 128 output lanes for lane-dense kernel stores; sliced to ner_cnt afterwards.
    limit = math.sqrt(6.0 / (hidden + ner_cnt))
    cls_w = jax.random.uniform(next(keys), (hidden, ner_cnt), jnp.float32, -limit, limit)
    p["cls_w_pad"] = jnp.pad(cls_w, ((0, 0), (0, lane_pad - ner_cnt))).astype(jnp.bfloat16)
    p["cls_b_pad"] = jnp.zeros((1, lane_pad), jnp.float32)
    return p


def bert_ner_forward(p, input_ids, token_type_ids, attention_mask):
    cfg = p["cfg"]
    B, S = input_ids.shape
    H = cfg["hidden"]

    # embeddings (gathers are glue); their LayerNorm runs inside the fused kernel.
    emb = (p["word_emb"][input_ids]
           + p["pos_emb"][jnp.arange(S)][None, :, :]
           + p["type_emb"][token_type_ids])
    x = emb.reshape(B * S, H).astype(jnp.float32)

    # Combined additive mask (B*S, B*S): -10000 for cross-batch pairs (block-diagonal) and for
    # padded keys (HF extended_attention_mask semantics); 0 otherwise.  exp underflows to 0 for
    # masked entries, so this is numerically identical to per-batch masked attention.
    seg = jnp.repeat(jnp.arange(B), S)
    key_ok = attention_mask.reshape(-1) > 0
    allow = (seg[:, None] == seg[None, :]) & key_ok[None, :]
    add_mask = jnp.where(allow, 0.0, -10000.0).astype(jnp.float32)

    # TODO(synk): BERT pooler output (result[1]) is computed by HF BertModel but unused by
    # BERT_NER.forward's returned dict; skipped here.
    logits_pad = bert_ner_fused(x, add_mask, p)
    logits = logits_pad.reshape(B, S, -1)[:, :, :cfg["ner_cnt"]]
    return {"ner_result": logits}


# --------------------------- Driver --------------------------------------------

if __name__ == "__main__":
    key = jax.random.PRNGKey(0)
    pkey, dkey = jax.random.split(key)
    params = init_params(pkey)

    B, S = 2, 8
    input_ids = jax.random.randint(dkey, (B, S), 0, 128, dtype=jnp.int32)
    token_type_ids = jnp.zeros((B, S), jnp.int32)
    attention_mask = jnp.ones((B, S), jnp.int32).at[1, 6:].set(0)  # ragged second sequence

    out = bert_ner_forward(params, input_ids, token_type_ids, attention_mask)
    ner = jax.block_until_ready(out["ner_result"])
    assert ner.shape == (B, S, 7) and ner.dtype == jnp.float32
    assert bool(jnp.all(jnp.isfinite(ner)))
    print("KERNEL_OK")
</pallas_src>

<mosaic_0001>
module attributes {stable_mosaic.version = 11 : i64} {
  func.func @_bert_ner_kernel(%arg0: memref<16x32xf32, #tpu.memory_space<vmem>>, %arg1: memref<16x16xf32, #tpu.memory_space<vmem>>, %arg2: memref<1x32xf32, #tpu.memory_space<vmem>>, %arg3: memref<1x32xf32, #tpu.memory_space<vmem>>, %arg4: memref<2x32x96xbf16, #tpu.memory_space<vmem>>, %arg5: memref<2x1x96xf32, #tpu.memory_space<vmem>>, %arg6: memref<2x32x32xbf16, #tpu.memory_space<vmem>>, %arg7: memref<2x1x32xf32, #tpu.memory_space<vmem>>, %arg8: memref<2x1x32xf32, #tpu.memory_space<vmem>>, %arg9: memref<2x1x32xf32, #tpu.memory_space<vmem>>, %arg10: memref<2x32x64xbf16, #tpu.memory_space<vmem>>, %arg11: memref<2x1x64xf32, #tpu.memory_space<vmem>>, %arg12: memref<2x64x32xbf16, #tpu.memory_space<vmem>>, %arg13: memref<2x1x32xf32, #tpu.memory_space<vmem>>, %arg14: memref<2x1x32xf32, #tpu.memory_space<vmem>>, %arg15: memref<2x1x32xf32, #tpu.memory_space<vmem>>, %arg16: memref<32x128xbf16, #tpu.memory_space<vmem>>, %arg17: memref<1x128xf32, #tpu.memory_space<vmem>>, %arg18: memref<16x128xf32, #tpu.memory_space<vmem>>) attributes {dimension_semantics = [], scalar_prefetch = 0 : i64, scratch_operands = 0 : i64, tpu.core_type = #tpu.core_type<tc>} {
    %c0 = arith.constant 0 : index
    %c0_0 = arith.constant 0 : index
    %0 = vector.load %arg0[%c0, %c0_0] : memref<16x32xf32, #tpu.memory_space<vmem>>, vector<16x32xf32>
    %c0_1 = arith.constant 0 : index
    %c0_2 = arith.constant 0 : index
    %1 = vector.load %arg2[%c0_1, %c0_2] : memref<1x32xf32, #tpu.memory_space<vmem>>, vector<1x32xf32>
    %c0_3 = arith.constant 0 : index
    %c0_4 = arith.constant 0 : index
    %2 = vector.load %arg3[%c0_3, %c0_4] : memref<1x32xf32, #tpu.memory_space<vmem>>, vector<1x32xf32>
    %cst = arith.constant dense<0.000000e+00> : vector<16xf32>
    %3 = vector.multi_reduction <add>, %0, %cst [1] : vector<16x32xf32> to vector<16xf32>
    %4 = vector.shape_cast %3 : vector<16xf32> to vector<16x1xf32>
    %cst_5 = arith.constant 3.200000e+01 : f32
    %5 = vector.broadcast %cst_5 : f32 to vector<16x1xf32>
    %6 = arith.divf %4, %5 : vector<16x1xf32>
    %7 = vector.broadcast %6 : vector<16x1xf32> to vector<16x32xf32>
    %8 = arith.subf %0, %7 : vector<16x32xf32>
    %9 = arith.mulf %8, %8 : vector<16x32xf32>
    %cst_6 = arith.constant dense<0.000000e+00> : vector<16xf32>
    %10 = vector.multi_reduction <add>, %9, %cst_6 [1] : vector<16x32xf32> to vector<16xf32>
    %11 = vector.shape_cast %10 : vector<16xf32> to vector<16x1xf32>
    %cst_7 = arith.constant 3.200000e+01 : f32
    %12 = vector.broadcast %cst_7 : f32 to vector<16x1xf32>
    %13 = arith.divf %11, %12 : vector<16x1xf32>
    %cst_8 = arith.constant 9.99999996E-13 : f32
    %14 = vector.broadcast %cst_8 : f32 to vector<16x1xf32>
    %15 = arith.addf %13, %14 : vector<16x1xf32>
    %16 = math.rsqrt %15 : vector<16x1xf32>
    %17 = vector.broadcast %16 : vector<16x1xf32> to vector<16x32xf32>
    %18 = arith.mulf %8, %17 : vector<16x32xf32>
    %19 = vector.broadcast %1 : vector<1x32xf32> to vector<16x32xf32>
    %20 = arith.mulf %18, %19 : vector<16x32xf32>
    %21 = vector.broadcast %2 : vector<1x32xf32> to vector<16x32xf32>
    %22 = arith.addf %20, %21 : vector<16x32xf32>
    %c0_9 = arith.constant 0 : index
    %c0_10 = arith.constant 0 : index
    %23 = vector.load %arg1[%c0_9, %c0_10] : memref<16x16xf32, #tpu.memory_space<vmem>>, vector<16x16xf32>
    %24 = tpu.concatenate %23, %23, %23, %23 in 0 : vector<16x16xf32>, vector<16x16xf32>, vector<16x16xf32>, vector<16x16xf32> -> vector<64x16xf32>
    %25 = tpu.iota {dimensions = array<i32: 1>} : vector<1x32xi32>
    %c0_i32 = arith.constant 0 : i32
    %26 = vector.broadcast %c0_i32 : i32 to vector<1x32xi32>
    %27 = arith.cmpi sge, %25, %26 : vector<1x32xi32>
    %c8_i32 = arith.constant 8 : i32
    %28 = vector.broadcast %c8_i32 : i32 to vector<1x32xi32>
    %29 = arith.cmpi slt, %25, %28 : vector<1x32xi32>
    %30 = arith.andi %27, %29 : vector<1x32xi1>
    %31 = arith.extui %30 : vector<1x32xi1> to vector<1x32xi32>
    %32 = arith.sitofp %31 : vector<1x32xi32> to vector<1x32xf32>
    %c8_i32_11 = arith.constant 8 : i32
    %33 = vector.broadcast %c8_i32_11 : i32 to vector<1x32xi32>
    %34 = arith.cmpi sge, %25, %33 : vector<1x32xi32>
    %c16_i32 = arith.constant 16 : i32
    %35 = vector.broadcast %c16_i32 : i32 to vector<1x32xi32>
    %36 = arith.cmpi slt, %25, %35 : vector<1x32xi32>
    %37 = arith.andi %34, %36 : vector<1x32xi1>
    %38 = arith.extui %37 : vector<1x32xi1> to vector<1x32xi32>
    %39 = arith.sitofp %38 : vector<1x32xi32> to vector<1x32xf32>
    %c16_i32_12 = arith.constant 16 : i32
    %40 = vector.broadcast %c16_i32_12 : i32 to vector<1x32xi32>
    %41 = arith.cmpi sge, %25, %40 : vector<1x32xi32>
    %c24_i32 = arith.constant 24 : i32
    %42 = vector.broadcast %c24_i32 : i32 to vector<1x32xi32>
    %43 = arith.cmpi slt, %25, %42 : vector<1x32xi32>
    %44 = arith.andi %41, %43 : vector<1x32xi1>
    %45 = arith.extui %44 : vector<1x32xi1> to vector<1x32xi32>
    %46 = arith.sitofp %45 : vector<1x32xi32> to vector<1x32xf32>
    %c24_i32_13 = arith.constant 24 : i32
    %47 = vector.broadcast %c24_i32_13 : i32 to vector<1x32xi32>
    %48 = arith.cmpi sge, %25, %47 : vector<1x32xi32>
    %c32_i32 = arith.constant 32 : i32
    %49 = vector.broadcast %c32_i32 : i32 to vector<1x32xi32>
    %50 = arith.cmpi slt, %25, %49 : vector<1x32xi32>
    %51 = arith.andi %48, %50 : vector<1x32xi1>
    %52 = arith.extui %51 : vector<1x32xi1> to vector<1x32xi32>
    %53 = arith.sitofp %52 : vector<1x32xi32> to vector<1x32xf32>
    %54 = arith.truncf %22 : vector<16x32xf32> to vector<16x32xbf16>
    %c0_14 = arith.constant 0 : index
    %c0_15 = arith.constant 0 : index
    %c0_16 = arith.constant 0 : index
    %55 = vector.load %arg4[%c0_14, %c0_15, %c0_16] : memref<2x32x96xbf16, #tpu.memory_space<vmem>>, vector<1x32x96xbf16>
    %56 = vector.shape_cast %55 : vector<1x32x96xbf16> to vector<32x96xbf16>
    %cst_17 = arith.constant dense<0.000000e+00> : vector<16x96xf32>
    %57 = tpu.matmul %54, %56, %cst_17 {dimension_numbers = #tpu.dot_dimension_numbers<[1], [0], [0], [1], [0, 0, 1, 1], [], []>} : vector<16x32xbf16>, vector<32x96xbf16>, vector<16x96xf32> -> vector<16x96xf32>
    %c0_18 = arith.constant 0 : index
    %c0_19 = arith.constant 0 : index
    %c0_20 = arith.constant 0 : index
    %58 = vector.load %arg5[%c0_18, %c0_19, %c0_20] : memref<2x1x96xf32, #tpu.memory_space<vmem>>, vector<1x1x96xf32>
    %59 = vector.shape_cast %58 : vector<1x1x96xf32> to vector<1x96xf32>
    %60 = vector.broadcast %59 : vector<1x96xf32> to vector<16x96xf32>
    %61 = arith.addf %57, %60 : vector<16x96xf32>
    %62 = vector.extract_strided_slice %61 {offsets = [0, 0], sizes = [16, 32], strides = [1, 1]} : vector<16x96xf32> to vector<16x32xf32>
    %63 = vector.extract_strided_slice %61 {offsets = [0, 32], sizes = [16, 32], strides = [1, 1]} : vector<16x96xf32> to vector<16x32xf32>
    %64 = vector.extract_strided_slice %61 {offsets = [0, 64], sizes = [16, 32], strides = [1, 1]} : vector<16x96xf32> to vector<16x32xf32>
    %65 = arith.truncf %63 : vector<16x32xf32> to vector<16x32xbf16>
    %66 = arith.truncf %64 : vector<16x32xf32> to vector<16x32xbf16>
    %67 = vector.broadcast %32 : vector<1x32xf32> to vector<16x32xf32>
    %68 = arith.mulf %62, %67 : vector<16x32xf32>
    %69 = vector.broadcast %39 : vector<1x32xf32> to vector<16x32xf32>
    %70 = arith.mulf %62, %69 : vector<16x32xf32>
    %71 = vector.broadcast %46 : vector<1x32xf32> to vector<16x32xf32>
    %72 = arith.mulf %62, %71 : vector<16x32xf32>
    %73 = vector.broadcast %53 : vector<1x32xf32> to vector<16x32xf32>
    %74 = arith.mulf %62, %73 : vector<16x32xf32>
    %75 = tpu.concatenate %68, %70, %72, %74 in 0 : vector<16x32xf32>, vector<16x32xf32>, vector<16x32xf32>, vector<16x32xf32> -> vector<64x32xf32>
    %76 = arith.truncf %75 : vector<64x32xf32> to vector<64x32xbf16>
    %cst_21 = arith.constant dense<0.000000e+00> : vector<64x16xf32>
    %77 = tpu.matmul %76, %65, %cst_21 {dimension_numbers = #tpu.dot_dimension_numbers<[1], [1], [0], [0], [0, 0, 1, 0], [], []>} : vector<64x32xbf16>, vector<16x32xbf16>, vector<64x16xf32> -> vector<64x16xf32>
    %78 = arith.addf %77, %24 : vector<64x16xf32>
    %cst_22 = arith.constant dense<0xFF800000> : vector<64xf32>
    %79 = vector.multi_reduction <maximumf>, %78, %cst_22 [1] : vector<64x16xf32> to vector<64xf32>
    %80 = vector.shape_cast %79 : vector<64xf32> to vector<64x1xf32>
    %81 = vector.broadcast %80 : vector<64x1xf32> to vector<64x16xf32>
    %82 = arith.subf %78, %81 : vector<64x16xf32>
    %83 = math.exp %82 : vector<64x16xf32>
    %cst_23 = arith.constant dense<0.000000e+00> : vector<64xf32>
    %84 = vector.multi_reduction <add>, %83, %cst_23 [1] : vector<64x16xf32> to vector<64xf32>
    %85 = vector.shape_cast %84 : vector<64xf32> to vector<64x1xf32>
    %86 = tpu.reciprocal %85 {approx = true} : vector<64x1xf32> -> vector<64x1xf32>
    %87 = vector.broadcast %86 : vector<64x1xf32> to vector<64x16xf32>
    %88 = arith.mulf %83, %87 : vector<64x16xf32>
    %89 = arith.truncf %88 : vector<64x16xf32> to vector<64x16xbf16>
    %cst_24 = arith.constant dense<0.000000e+00> : vector<64x32xf32>
    %90 = tpu.matmul %89, %66, %cst_24 {dimension_numbers = #tpu.dot_dimension_numbers<[1], [0], [0], [1], [0, 0, 1, 1], [], []>} : vector<64x16xbf16>, vector<16x32xbf16>, vector<64x32xf32> -> vector<64x32xf32>
    %91 = vector.extract_strided_slice %90 {offsets = [0, 0], sizes = [16, 32], strides = [1, 1]} : vector<64x32xf32> to vector<16x32xf32>
    %92 = vector.broadcast %32 : vector<1x32xf32> to vector<16x32xf32>
    %93 = arith.mulf %92, %91 : vector<16x32xf32>
    %94 = vector.extract_strided_slice %90 {offsets = [16, 0], sizes = [16, 32], strides = [1, 1]} : vector<64x32xf32> to vector<16x32xf32>
    %95 = vector.broadcast %39 : vector<1x32xf32> to vector<16x32xf32>
    %96 = arith.mulf %95, %94 : vector<16x32xf32>
    %97 = arith.addf %93, %96 : vector<16x32xf32>
    %98 = vector.extract_strided_slice %90 {offsets = [32, 0], sizes = [16, 32], strides = [1, 1]} : vector<64x32xf32> to vector<16x32xf32>
    %99 = vector.broadcast %46 : vector<1x32xf32> to vector<16x32xf32>
    %100 = arith.mulf %99, %98 : vector<16x32xf32>
    %101 = arith.addf %97, %100 : vector<16x32xf32>
    %102 = vector.extract_strided_slice %90 {offsets = [48, 0], sizes = [16, 32], strides = [1, 1]} : vector<64x32xf32> to vector<16x32xf32>
    %103 = vector.broadcast %53 : vector<1x32xf32> to vector<16x32xf32>
    %104 = arith.mulf %103, %102 : vector<16x32xf32>
    %105 = arith.addf %101, %104 : vector<16x32xf32>
    %106 = arith.truncf %105 : vector<16x32xf32> to vector<16x32xbf16>
    %c0_25 = arith.constant 0 : index
    %c0_26 = arith.constant 0 : index
    %c0_27 = arith.constant 0 : index
    %107 = vector.load %arg6[%c0_25, %c0_26, %c0_27] : memref<2x32x32xbf16, #tpu.memory_space<vmem>>, vector<1x32x32xbf16>
    %108 = vector.shape_cast %107 : vector<1x32x32xbf16> to vector<32x32xbf16>
    %cst_28 = arith.constant dense<0.000000e+00> : vector<16x32xf32>
    %109 = tpu.matmul %106, %108, %cst_28 {dimension_numbers = #tpu.dot_dimension_numbers<[1], [0], [0], [1], [0, 0, 1, 1], [], []>} : vector<16x32xbf16>, vector<32x32xbf16>, vector<16x32xf32> -> vector<16x32xf32>
    %c0_29 = arith.constant 0 : index
    %c0_30 = arith.constant 0 : index
    %c0_31 = arith.constant 0 : index
    %110 = vector.load %arg7[%c0_29, %c0_30, %c0_31] : memref<2x1x32xf32, #tpu.memory_space<vmem>>, vector<1x1x32xf32>
    %111 = vector.shape_cast %110 : vector<1x1x32xf32> to vector<1x32xf32>
    %112 = vector.broadcast %111 : vector<1x32xf32> to vector<16x32xf32>
    %113 = arith.addf %109, %112 : vector<16x32xf32>
    %114 = arith.addf %113, %22 : vector<16x32xf32>
    %c0_32 = arith.constant 0 : index
    %c0_33 = arith.constant 0 : index
    %c0_34 = arith.constant 0 : index
    %115 = vector.load %arg8[%c0_32, %c0_33, %c0_34] : memref<2x1x32xf32, #tpu.memory_space<vmem>>, vector<1x1x32xf32>
    %116 = vector.shape_cast %115 : vector<1x1x32xf32> to vector<1x32xf32>
    %c0_35 = arith.constant 0 : index
    %c0_36 = arith.constant 0 : index
    %c0_37 = arith.constant 0 : index
    %117 = vector.load %arg9[%c0_35, %c0_36, %c0_37] : memref<2x1x32xf32, #tpu.memory_space<vmem>>, vector<1x1x32xf32>
    %118 = vector.shape_cast %117 : vector<1x1x32xf32> to vector<1x32xf32>
    %cst_38 = arith.constant dense<0.000000e+00> : vector<16xf32>
    %119 = vector.multi_reduction <add>, %114, %cst_38 [1] : vector<16x32xf32> to vector<16xf32>
    %120 = vector.shape_cast %119 : vector<16xf32> to vector<16x1xf32>
    %cst_39 = arith.constant 3.200000e+01 : f32
    %121 = vector.broadcast %cst_39 : f32 to vector<16x1xf32>
    %122 = arith.divf %120, %121 : vector<16x1xf32>
    %123 = vector.broadcast %122 : vector<16x1xf32> to vector<16x32xf32>
    %124 = arith.subf %114, %123 : vector<16x32xf32>
    %125 = arith.mulf %124, %124 : vector<16x32xf32>
    %cst_40 = arith.constant dense<0.000000e+00> : vector<16xf32>
    %126 = vector.multi_reduction <add>, %125, %cst_40 [1] : vector<16x32xf32> to vector<16xf32>
    %127 = vector.shape_cast %126 : vector<16xf32> to vector<16x1xf32>
    %cst_41 = arith.constant 3.200000e+01 : f32
    %128 = vector.broadcast %cst_41 : f32 to vector<16x1xf32>
    %129 = arith.divf %127, %128 : vector<16x1xf32>
    %cst_42 = arith.constant 9.99999996E-13 : f32
    %130 = vector.broadcast %cst_42 : f32 to vector<16x1xf32>
    %131 = arith.addf %129, %130 : vector<16x1xf32>
    %132 = math.rsqrt %131 : vector<16x1xf32>
    %133 = vector.broadcast %132 : vector<16x1xf32> to vector<16x32xf32>
    %134 = arith.mulf %124, %133 : vector<16x32xf32>
    %135 = vector.broadcast %116 : vector<1x32xf32> to vector<16x32xf32>
    %136 = arith.mulf %134, %135 : vector<16x32xf32>
    %137 = vector.broadcast %118 : vector<1x32xf32> to vector<16x32xf32>
    %138 = arith.addf %136, %137 : vector<16x32xf32>
    %139 = arith.truncf %138 : vector<16x32xf32> to vector<16x32xbf16>
    %c0_43 = arith.constant 0 : index
    %c0_44 = arith.constant 0 : index
    %c0_45 = arith.constant 0 : index
    %140 = vector.load %arg10[%c0_43, %c0_44, %c0_45] : memref<2x32x64xbf16, #tpu.memory_space<vmem>>, vector<1x32x64xbf16>
    %141 = vector.shape_cast %140 : vector<1x32x64xbf16> to vector<32x64xbf16>
    %cst_46 = arith.constant dense<0.000000e+00> : vector<16x64xf32>
    %142 = tpu.matmul %139, %141, %cst_46 {dimension_numbers = #tpu.dot_dimension_numbers<[1], [0], [0], [1], [0, 0, 1, 1], [], []>} : vector<16x32xbf16>, vector<32x64xbf16>, vector<16x64xf32> -> vector<16x64xf32>
    %c0_47 = arith.constant 0 : index
    %c0_48 = arith.constant 0 : index
    %c0_49 = arith.constant 0 : index
    %143 = vector.load %arg11[%c0_47, %c0_48, %c0_49] : memref<2x1x64xf32, #tpu.memory_space<vmem>>, vector<1x1x64xf32>
    %144 = vector.shape_cast %143 : vector<1x1x64xf32> to vector<1x64xf32>
    %145 = vector.broadcast %144 : vector<1x64xf32> to vector<16x64xf32>
    %146 = arith.addf %142, %145 : vector<16x64xf32>
    %cst_50 = arith.constant 5.000000e-01 : f32
    %147 = vector.broadcast %cst_50 : f32 to vector<16x64xf32>
    %148 = arith.mulf %147, %146 : vector<16x64xf32>
    %cst_51 = arith.constant 4.471500e-02 : f32
    %149 = vector.broadcast %cst_51 : f32 to vector<16x64xf32>
    %150 = arith.mulf %149, %146 : vector<16x64xf32>
    %151 = arith.mulf %150, %146 : vector<16x64xf32>
    %152 = arith.mulf %151, %146 : vector<16x64xf32>
    %153 = arith.addf %146, %152 : vector<16x64xf32>
    %cst_52 = arith.constant 0.797884583 : f32
    %154 = vector.broadcast %cst_52 : f32 to vector<16x64xf32>
    %155 = arith.mulf %154, %153 : vector<16x64xf32>
    %156 = math.tanh %155 : vector<16x64xf32>
    %cst_53 = arith.constant 1.000000e+00 : f32
    %157 = vector.broadcast %cst_53 : f32 to vector<16x64xf32>
    %158 = arith.addf %157, %156 : vector<16x64xf32>
    %159 = arith.mulf %148, %158 : vector<16x64xf32>
    %160 = arith.truncf %159 : vector<16x64xf32> to vector<16x64xbf16>
    %c0_54 = arith.constant 0 : index
    %c0_55 = arith.constant 0 : index
    %c0_56 = arith.constant 0 : index
    %161 = vector.load %arg12[%c0_54, %c0_55, %c0_56] : memref<2x64x32xbf16, #tpu.memory_space<vmem>>, vector<1x64x32xbf16>
    %162 = vector.shape_cast %161 : vector<1x64x32xbf16> to vector<64x32xbf16>
    %cst_57 = arith.constant dense<0.000000e+00> : vector<16x32xf32>
    %163 = tpu.matmul %160, %162, %cst_57 {dimension_numbers = #tpu.dot_dimension_numbers<[1], [0], [0], [1], [0, 0, 1, 1], [], []>} : vector<16x64xbf16>, vector<64x32xbf16>, vector<16x32xf32> -> vector<16x32xf32>
    %c0_58 = arith.constant 0 : index
    %c0_59 = arith.constant 0 : index
    %c0_60 = arith.constant 0 : index
    %164 = vector.load %arg13[%c0_58, %c0_59, %c0_60] : memref<2x1x32xf32, #tpu.memory_space<vmem>>, vector<1x1x32xf32>
    %165 = vector.shape_cast %164 : vector<1x1x32xf32> to vector<1x32xf32>
    %166 = vector.broadcast %165 : vector<1x32xf32> to vector<16x32xf32>
    %167 = arith.addf %163, %166 : vector<16x32xf32>
    %168 = arith.addf %167, %138 : vector<16x32xf32>
    %c0_61 = arith.constant 0 : index
    %c0_62 = arith.constant 0 : index
    %c0_63 = arith.constant 0 : index
    %169 = vector.load %arg14[%c0_61, %c0_62, %c0_63] : memref<2x1x32xf32, #tpu.memory_space<vmem>>, vector<1x1x32xf32>
    %170 = vector.shape_cast %169 : vector<1x1x32xf32> to vector<1x32xf32>
    %c0_64 = arith.constant 0 : index
    %c0_65 = arith.constant 0 : index
    %c0_66 = arith.constant 0 : index
    %171 = vector.load %arg15[%c0_64, %c0_65, %c0_66] : memref<2x1x32xf32, #tpu.memory_space<vmem>>, vector<1x1x32xf32>
    %172 = vector.shape_cast %171 : vector<1x1x32xf32> to vector<1x32xf32>
    %cst_67 = arith.constant dense<0.000000e+00> : vector<16xf32>
    %173 = vector.multi_reduction <add>, %168, %cst_67 [1] : vector<16x32xf32> to vector<16xf32>
    %174 = vector.shape_cast %173 : vector<16xf32> to vector<16x1xf32>
    %cst_68 = arith.constant 3.200000e+01 : f32
    %175 = vector.broadcast %cst_68 : f32 to vector<16x1xf32>
    %176 = arith.divf %174, %175 : vector<16x1xf32>
    %177 = vector.broadcast %176 : vector<16x1xf32> to vector<16x32xf32>
    %178 = arith.subf %168, %177 : vector<16x32xf32>
    %179 = arith.mulf %178, %178 : vector<16x32xf32>
    %cst_69 = arith.constant dense<0.000000e+00> : vector<16xf32>
    %180 = vector.multi_reduction <add>, %179, %cst_69 [1] : vector<16x32xf32> to vector<16xf32>
    %181 = vector.shape_cast %180 : vector<16xf32> to vector<16x1xf32>
    %cst_70 = arith.constant 3.200000e+01 : f32
    %182 = vector.broadcast %cst_70 : f32 to vector<16x1xf32>
    %183 = arith.divf %181, %182 : vector<16x1xf32>
    %cst_71 = arith.constant 9.99999996E-13 : f32
    %184 = vector.broadcast %cst_71 : f32 to vector<16x1xf32>
    %185 = arith.addf %183, %184 : vector<16x1xf32>
    %186 = math.rsqrt %185 : vector<16x1xf32>
    %187 = vector.broadcast %186 : vector<16x1xf32> to vector<16x32xf32>
    %188 = arith.mulf %178, %187 : vector<16x32xf32>
    %189 = vector.broadcast %170 : vector<1x32xf32> to vector<16x32xf32>
    %190 = arith.mulf %188, %189 : vector<16x32xf32>
    %191 = vector.broadcast %172 : vector<1x32xf32> to vector<16x32xf32>
    %192 = arith.addf %190, %191 : vector<16x32xf32>
    %193 = arith.truncf %192 : vector<16x32xf32> to vector<16x32xbf16>
    %c1 = arith.constant 1 : index
    %c0_72 = arith.constant 0 : index
    %c0_73 = arith.constant 0 : index
    %194 = vector.load %arg4[%c1, %c0_72, %c0_73] : memref<2x32x96xbf16, #tpu.memory_space<vmem>>, vector<1x32x96xbf16>
    %195 = vector.shape_cast %194 : vector<1x32x96xbf16> to vector<32x96xbf16>
    %cst_74 = arith.constant dense<0.000000e+00> : vector<16x96xf32>
    %196 = tpu.matmul %193, %195, %cst_74 {dimension_numbers = #tpu.dot_dimension_numbers<[1], [0], [0], [1], [0, 0, 1, 1], [], []>} : vector<16x32xbf16>, vector<32x96xbf16>, vector<16x96xf32> -> vector<16x96xf32>
    %c1_75 = arith.constant 1 : index
    %c0_76 = arith.constant 0 : index
    %c0_77 = arith.constant 0 : index
    %197 = vector.load %arg5[%c1_75, %c0_76, %c0_77] : memref<2x1x96xf32, #tpu.memory_space<vmem>>, vector<1x1x96xf32>
    %198 = vector.shape_cast %197 : vector<1x1x96xf32> to vector<1x96xf32>
    %199 = vector.broadcast %198 : vector<1x96xf32> to vector<16x96xf32>
    %200 = arith.addf %196, %199 : vector<16x96xf32>
    %201 = vector.extract_strided_slice %200 {offsets = [0, 0], sizes = [16, 32], strides = [1, 1]} : vector<16x96xf32> to vector<16x32xf32>
    %202 = vector.extract_strided_slice %200 {offsets = [0, 32], sizes = [16, 32], strides = [1, 1]} : vector<16x96xf32> to vector<16x32xf32>
    %203 = vector.extract_strided_slice %200 {offsets = [0, 64], sizes = [16, 32], strides = [1, 1]} : vector<16x96xf32> to vector<16x32xf32>
    %204 = arith.truncf %202 : vector<16x32xf32> to vector<16x32xbf16>
    %205 = arith.truncf %203 : vector<16x32xf32> to vector<16x32xbf16>
    %206 = vector.broadcast %32 : vector<1x32xf32> to vector<16x32xf32>
    %207 = arith.mulf %201, %206 : vector<16x32xf32>
    %208 = vector.broadcast %39 : vector<1x32xf32> to vector<16x32xf32>
    %209 = arith.mulf %201, %208 : vector<16x32xf32>
    %210 = vector.broadcast %46 : vector<1x32xf32> to vector<16x32xf32>
    %211 = arith.mulf %201, %210 : vector<16x32xf32>
    %212 = vector.broadcast %53 : vector<1x32xf32> to vector<16x32xf32>
    %213 = arith.mulf %201, %212 : vector<16x32xf32>
    %214 = tpu.concatenate %207, %209, %211, %213 in 0 : vector<16x32xf32>, vector<16x32xf32>, vector<16x32xf32>, vector<16x32xf32> -> vector<64x32xf32>
    %215 = arith.truncf %214 : vector<64x32xf32> to vector<64x32xbf16>
    %cst_78 = arith.constant dense<0.000000e+00> : vector<64x16xf32>
    %216 = tpu.matmul %215, %204, %cst_78 {dimension_numbers = #tpu.dot_dimension_numbers<[1], [1], [0], [0], [0, 0, 1, 0], [], []>} : vector<64x32xbf16>, vector<16x32xbf16>, vector<64x16xf32> -> vector<64x16xf32>
    %217 = arith.addf %216, %24 : vector<64x16xf32>
    %cst_79 = arith.constant dense<0xFF800000> : vector<64xf32>
    %218 = vector.multi_reduction <maximumf>, %217, %cst_79 [1] : vector<64x16xf32> to vector<64xf32>
    %219 = vector.shape_cast %218 : vector<64xf32> to vector<64x1xf32>
    %220 = vector.broadcast %219 : vector<64x1xf32> to vector<64x16xf32>
    %221 = arith.subf %217, %220 : vector<64x16xf32>
    %222 = math.exp %221 : vector<64x16xf32>
    %cst_80 = arith.constant dense<0.000000e+00> : vector<64xf32>
    %223 = vector.multi_reduction <add>, %222, %cst_80 [1] : vector<64x16xf32> to vector<64xf32>
    %224 = vector.shape_cast %223 : vector<64xf32> to vector<64x1xf32>
    %225 = tpu.reciprocal %224 {approx = true} : vector<64x1xf32> -> vector<64x1xf32>
    %226 = vector.broadcast %225 : vector<64x1xf32> to vector<64x16xf32>
    %227 = arith.mulf %222, %226 : vector<64x16xf32>
    %228 = arith.truncf %227 : vector<64x16xf32> to vector<64x16xbf16>
    %cst_81 = arith.constant dense<0.000000e+00> : vector<64x32xf32>
    %229 = tpu.matmul %228, %205, %cst_81 {dimension_numbers = #tpu.dot_dimension_numbers<[1], [0], [0], [1], [0, 0, 1, 1], [], []>} : vector<64x16xbf16>, vector<16x32xbf16>, vector<64x32xf32> -> vector<64x32xf32>
    %230 = vector.extract_strided_slice %229 {offsets = [0, 0], sizes = [16, 32], strides = [1, 1]} : vector<64x32xf32> to vector<16x32xf32>
    %231 = vector.broadcast %32 : vector<1x32xf32> to vector<16x32xf32>
    %232 = arith.mulf %231, %230 : vector<16x32xf32>
    %233 = vector.extract_strided_slice %229 {offsets = [16, 0], sizes = [16, 32], strides = [1, 1]} : vector<64x32xf32> to vector<16x32xf32>
    %234 = vector.broadcast %39 : vector<1x32xf32> to vector<16x32xf32>
    %235 = arith.mulf %234, %233 : vector<16x32xf32>
    %236 = arith.addf %232, %235 : vector<16x32xf32>
    %237 = vector.extract_strided_slice %229 {offsets = [32, 0], sizes = [16, 32], strides = [1, 1]} : vector<64x32xf32> to vector<16x32xf32>
    %238 = vector.broadcast %46 : vector<1x32xf32> to vector<16x32xf32>
    %239 = arith.mulf %238, %237 : vector<16x32xf32>
    %240 = arith.addf %236, %239 : vector<16x32xf32>
    %241 = vector.extract_strided_slice %229 {offsets = [48, 0], sizes = [16, 32], strides = [1, 1]} : vector<64x32xf32> to vector<16x32xf32>
    %242 = vector.broadcast %53 : vector<1x32xf32> to vector<16x32xf32>
    %243 = arith.mulf %242, %241 : vector<16x32xf32>
    %244 = arith.addf %240, %243 : vector<16x32xf32>
    %245 = arith.truncf %244 : vector<16x32xf32> to vector<16x32xbf16>
    %c1_82 = arith.constant 1 : index
    %c0_83 = arith.constant 0 : index
    %c0_84 = arith.constant 0 : index
    %246 = vector.load %arg6[%c1_82, %c0_83, %c0_84] : memref<2x32x32xbf16, #tpu.memory_space<vmem>>, vector<1x32x32xbf16>
    %247 = vector.shape_cast %246 : vector<1x32x32xbf16> to vector<32x32xbf16>
    %cst_85 = arith.constant dense<0.000000e+00> : vector<16x32xf32>
    %248 = tpu.matmul %245, %247, %cst_85 {dimension_numbers = #tpu.dot_dimension_numbers<[1], [0], [0], [1], [0, 0, 1, 1], [], []>} : vector<16x32xbf16>, vector<32x32xbf16>, vector<16x32xf32> -> vector<16x32xf32>
    %c1_86 = arith.constant 1 : index
    %c0_87 = arith.constant 0 : index
    %c0_88 = arith.constant 0 : index
    %249 = vector.load %arg7[%c1_86, %c0_87, %c0_88] : memref<2x1x32xf32, #tpu.memory_space<vmem>>, vector<1x1x32xf32>
    %250 = vector.shape_cast %249 : vector<1x1x32xf32> to vector<1x32xf32>
    %251 = vector.broadcast %250 : vector<1x32xf32> to vector<16x32xf32>
    %252 = arith.addf %248, %251 : vector<16x32xf32>
    %253 = arith.addf %252, %192 : vector<16x32xf32>
    %c1_89 = arith.constant 1 : index
    %c0_90 = arith.constant 0 : index
    %c0_91 = arith.constant 0 : index
    %254 = vector.load %arg8[%c1_89, %c0_90, %c0_91] : memref<2x1x32xf32, #tpu.memory_space<vmem>>, vector<1x1x32xf32>
    %255 = vector.shape_cast %254 : vector<1x1x32xf32> to vector<1x32xf32>
    %c1_92 = arith.constant 1 : index
    %c0_93 = arith.constant 0 : index
    %c0_94 = arith.constant 0 : index
    %256 = vector.load %arg9[%c1_92, %c0_93, %c0_94] : memref<2x1x32xf32, #tpu.memory_space<vmem>>, vector<1x1x32xf32>
    %257 = vector.shape_cast %256 : vector<1x1x32xf32> to vector<1x32xf32>
    %cst_95 = arith.constant dense<0.000000e+00> : vector<16xf32>
    %258 = vector.multi_reduction <add>, %253, %cst_95 [1] : vector<16x32xf32> to vector<16xf32>
    %259 = vector.shape_cast %258 : vector<16xf32> to vector<16x1xf32>
    %cst_96 = arith.constant 3.200000e+01 : f32
    %260 = vector.broadcast %cst_96 : f32 to vector<16x1xf32>
    %261 = arith.divf %259, %260 : vector<16x1xf32>
    %262 = vector.broadcast %261 : vector<16x1xf32> to vector<16x32xf32>
    %263 = arith.subf %253, %262 : vector<16x32xf32>
    %264 = arith.mulf %263, %263 : vector<16x32xf32>
    %cst_97 = arith.constant dense<0.000000e+00> : vector<16xf32>
    %265 = vector.multi_reduction <add>, %264, %cst_97 [1] : vector<16x32xf32> to vector<16xf32>
    %266 = vector.shape_cast %265 : vector<16xf32> to vector<16x1xf32>
    %cst_98 = arith.constant 3.200000e+01 : f32
    %267 = vector.broadcast %cst_98 : f32 to vector<16x1xf32>
    %268 = arith.divf %266, %267 : vector<16x1xf32>
    %cst_99 = arith.constant 9.99999996E-13 : f32
    %269 = vector.broadcast %cst_99 : f32 to vector<16x1xf32>
    %270 = arith.addf %268, %269 : vector<16x1xf32>
    %271 = math.rsqrt %270 : vector<16x1xf32>
    %272 = vector.broadcast %271 : vector<16x1xf32> to vector<16x32xf32>
    %273 = arith.mulf %263, %272 : vector<16x32xf32>
    %274 = vector.broadcast %255 : vector<1x32xf32> to vector<16x32xf32>
    %275 = arith.mulf %273, %274 : vector<16x32xf32>
    %276 = vector.broadcast %257 : vector<1x32xf32> to vector<16x32xf32>
    %277 = arith.addf %275, %276 : vector<16x32xf32>
    %278 = arith.truncf %277 : vector<16x32xf32> to vector<16x32xbf16>
    %c1_100 = arith.constant 1 : index
    %c0_101 = arith.constant 0 : index
    %c0_102 = arith.constant 0 : index
    %279 = vector.load %arg10[%c1_100, %c0_101, %c0_102] : memref<2x32x64xbf16, #tpu.memory_space<vmem>>, vector<1x32x64xbf16>
    %280 = vector.shape_cast %279 : vector<1x32x64xbf16> to vector<32x64xbf16>
    %cst_103 = arith.constant dense<0.000000e+00> : vector<16x64xf32>
    %281 = tpu.matmul %278, %280, %cst_103 {dimension_numbers = #tpu.dot_dimension_numbers<[1], [0], [0], [1], [0, 0, 1, 1], [], []>} : vector<16x32xbf16>, vector<32x64xbf16>, vector<16x64xf32> -> vector<16x64xf32>
    %c1_104 = arith.constant 1 : index
    %c0_105 = arith.constant 0 : index
    %c0_106 = arith.constant 0 : index
    %282 = vector.load %arg11[%c1_104, %c0_105, %c0_106] : memref<2x1x64xf32, #tpu.memory_space<vmem>>, vector<1x1x64xf32>
    %283 = vector.shape_cast %282 : vector<1x1x64xf32> to vector<1x64xf32>
    %284 = vector.broadcast %283 : vector<1x64xf32> to vector<16x64xf32>
    %285 = arith.addf %281, %284 : vector<16x64xf32>
    %cst_107 = arith.constant 5.000000e-01 : f32
    %286 = vector.broadcast %cst_107 : f32 to vector<16x64xf32>
    %287 = arith.mulf %286, %285 : vector<16x64xf32>
    %cst_108 = arith.constant 4.471500e-02 : f32
    %288 = vector.broadcast %cst_108 : f32 to vector<16x64xf32>
    %289 = arith.mulf %288, %285 : vector<16x64xf32>
    %290 = arith.mulf %289, %285 : vector<16x64xf32>
    %291 = arith.mulf %290, %285 : vector<16x64xf32>
    %292 = arith.addf %285, %291 : vector<16x64xf32>
    %cst_109 = arith.constant 0.797884583 : f32
    %293 = vector.broadcast %cst_109 : f32 to vector<16x64xf32>
    %294 = arith.mulf %293, %292 : vector<16x64xf32>
    %295 = math.tanh %294 : vector<16x64xf32>
    %cst_110 = arith.constant 1.000000e+00 : f32
    %296 = vector.broadcast %cst_110 : f32 to vector<16x64xf32>
    %297 = arith.addf %296, %295 : vector<16x64xf32>
    %298 = arith.mulf %287, %297 : vector<16x64xf32>
    %299 = arith.truncf %298 : vector<16x64xf32> to vector<16x64xbf16>
    %c1_111 = arith.constant 1 : index
    %c0_112 = arith.constant 0 : index
    %c0_113 = arith.constant 0 : index
    %300 = vector.load %arg12[%c1_111, %c0_112, %c0_113] : memref<2x64x32xbf16, #tpu.memory_space<vmem>>, vector<1x64x32xbf16>
    %301 = vector.shape_cast %300 : vector<1x64x32xbf16> to vector<64x32xbf16>
    %cst_114 = arith.constant dense<0.000000e+00> : vector<16x32xf32>
    %302 = tpu.matmul %299, %301, %cst_114 {dimension_numbers = #tpu.dot_dimension_numbers<[1], [0], [0], [1], [0, 0, 1, 1], [], []>} : vector<16x64xbf16>, vector<64x32xbf16>, vector<16x32xf32> -> vector<16x32xf32>
    %c1_115 = arith.constant 1 : index
    %c0_116 = arith.constant 0 : index
    %c0_117 = arith.constant 0 : index
    %303 = vector.load %arg13[%c1_115, %c0_116, %c0_117] : memref<2x1x32xf32, #tpu.memory_space<vmem>>, vector<1x1x32xf32>
    %304 = vector.shape_cast %303 : vector<1x1x32xf32> to vector<1x32xf32>
    %305 = vector.broadcast %304 : vector<1x32xf32> to vector<16x32xf32>
    %306 = arith.addf %302, %305 : vector<16x32xf32>
    %307 = arith.addf %306, %277 : vector<16x32xf32>
    %c1_118 = arith.constant 1 : index
    %c0_119 = arith.constant 0 : index
    %c0_120 = arith.constant 0 : index
    %308 = vector.load %arg14[%c1_118, %c0_119, %c0_120] : memref<2x1x32xf32, #tpu.memory_space<vmem>>, vector<1x1x32xf32>
    %309 = vector.shape_cast %308 : vector<1x1x32xf32> to vector<1x32xf32>
    %c1_121 = arith.constant 1 : index
    %c0_122 = arith.constant 0 : index
    %c0_123 = arith.constant 0 : index
    %310 = vector.load %arg15[%c1_121, %c0_122, %c0_123] : memref<2x1x32xf32, #tpu.memory_space<vmem>>, vector<1x1x32xf32>
    %311 = vector.shape_cast %310 : vector<1x1x32xf32> to vector<1x32xf32>
    %cst_124 = arith.constant dense<0.000000e+00> : vector<16xf32>
    %312 = vector.multi_reduction <add>, %307, %cst_124 [1] : vector<16x32xf32> to vector<16xf32>
    %313 = vector.shape_cast %312 : vector<16xf32> to vector<16x1xf32>
    %cst_125 = arith.constant 3.200000e+01 : f32
    %314 = vector.broadcast %cst_125 : f32 to vector<16x1xf32>
    %315 = arith.divf %313, %314 : vector<16x1xf32>
    %316 = vector.broadcast %315 : vector<16x1xf32> to vector<16x32xf32>
    %317 = arith.subf %307, %316 : vector<16x32xf32>
    %318 = arith.mulf %317, %317 : vector<16x32xf32>
    %cst_126 = arith.constant dense<0.000000e+00> : vector<16xf32>
    %319 = vector.multi_reduction <add>, %318, %cst_126 [1] : vector<16x32xf32> to vector<16xf32>
    %320 = vector.shape_cast %319 : vector<16xf32> to vector<16x1xf32>
    %cst_127 = arith.constant 3.200000e+01 : f32
    %321 = vector.broadcast %cst_127 : f32 to vector<16x1xf32>
    %322 = arith.divf %320, %321 : vector<16x1xf32>
    %cst_128 = arith.constant 9.99999996E-13 : f32
    %323 = vector.broadcast %cst_128 : f32 to vector<16x1xf32>
    %324 = arith.addf %322, %323 : vector<16x1xf32>
    %325 = math.rsqrt %324 : vector<16x1xf32>
    %326 = vector.broadcast %325 : vector<16x1xf32> to vector<16x32xf32>
    %327 = arith.mulf %317, %326 : vector<16x32xf32>
    %328 = vector.broadcast %309 : vector<1x32xf32> to vector<16x32xf32>
    %329 = arith.mulf %327, %328 : vector<16x32xf32>
    %330 = vector.broadcast %311 : vector<1x32xf32> to vector<16x32xf32>
    %331 = arith.addf %329, %330 : vector<16x32xf32>
    %332 = arith.truncf %331 : vector<16x32xf32> to vector<16x32xbf16>
    %c0_129 = arith.constant 0 : index
    %c0_130 = arith.constant 0 : index
    %333 = vector.load %arg16[%c0_129, %c0_130] : memref<32x128xbf16, #tpu.memory_space<vmem>>, vector<32x128xbf16>
    %cst_131 = arith.constant dense<0.000000e+00> : vector<16x128xf32>
    %334 = tpu.matmul %332, %333, %cst_131 {dimension_numbers = #tpu.dot_dimension_numbers<[1], [0], [0], [1], [0, 0, 1, 1], [], []>} : vector<16x32xbf16>, vector<32x128xbf16>, vector<16x128xf32> -> vector<16x128xf32>
    %c0_132 = arith.constant 0 : index
    %c0_133 = arith.constant 0 : index
    %335 = vector.load %arg17[%c0_132, %c0_133] : memref<1x128xf32, #tpu.memory_space<vmem>>, vector<1x128xf32>
    %336 = vector.broadcast %335 : vector<1x128xf32> to vector<16x128xf32>
    %337 = arith.addf %334, %336 : vector<16x128xf32>
    %c0_134 = arith.constant 0 : index
    %c0_135 = arith.constant 0 : index
    %338 = vector.load %arg18[%c0_134, %c0_135] : memref<16x128xf32, #tpu.memory_space<vmem>>, vector<16x128xf32>
    tpu.vector_store %arg18[%c0_134, %c0_135], %337 {strides = array<i32>} : memref<16x128xf32, #tpu.memory_space<vmem>>, vector<16x128xf32>,
    return
  }
}

</mosaic_0001>

<llo_original>
// kernel: tpu_custom_call.1
$region0: #{tpu_custom_call.1}
  #allocation0 [shape = 'u32[]', space=smem, size = 0x4, offset = 0x4, fixed_abs, tag = 'smem constant byte address 0x4 - core index']
  #allocation1 [shape = 'u32[144,128]{1,0:T(1,128)}', space=vmem, size = 0x12000, scoped, tag = 'internal scratch']
  %s0 = inlined_call_operand.hbm [shape: f32[16,32], index: 0, kind: input, shape index: {}]
  %s1 = inlined_call_operand.hbm [shape: f32[16,16], index: 1, kind: input, shape index: {}]
  %s2 = inlined_call_operand.vmem [shape: f32[1,32], index: 2, kind: input, shape index: {}]
  %s3 = inlined_call_operand.hbm [shape: f32[1,32], index: 3, kind: input, shape index: {}]
  %s4 = inlined_call_operand.vmem [shape: bf16[2,32,96], index: 4, kind: input, shape index: {}]
  %s5 = inlined_call_operand.hbm [shape: f32[2,1,96], index: 5, kind: input, shape index: {}]
  %s6 = inlined_call_operand.vmem [shape: bf16[2,32,32], index: 6, kind: input, shape index: {}]
  %s7 = inlined_call_operand.hbm [shape: f32[2,1,32], index: 7, kind: input, shape index: {}]
  %s8 = inlined_call_operand.hbm [shape: f32[2,1,32], index: 8, kind: input, shape index: {}]
  %s9 = inlined_call_operand.hbm [shape: f32[2,1,32], index: 9, kind: input, shape index: {}]
  %s10 = inlined_call_operand.vmem [shape: bf16[2,32,64], index: 10, kind: input, shape index: {}]
  %s11 = inlined_call_operand.hbm [shape: f32[2,1,64], index: 11, kind: input, shape index: {}]
  %s12 = inlined_call_operand.vmem [shape: bf16[2,64,32], index: 12, kind: input, shape index: {}]
  %s13 = inlined_call_operand.hbm [shape: f32[2,1,32], index: 13, kind: input, shape index: {}]
  %s14 = inlined_call_operand.vmem [shape: f32[2,1,32], index: 14, kind: input, shape index: {}]
  %s15 = inlined_call_operand.vmem [shape: f32[2,1,32], index: 15, kind: input, shape index: {}]
  %s16 = inlined_call_operand.vmem [shape: bf16[32,128], index: 16, kind: input, shape index: {}]
  %s17 = inlined_call_operand.vmem [shape: f32[1,128], index: 17, kind: input, shape index: {}]
  %s18 = inlined_call_operand.hbm [shape: f32[16,128], index: 18, kind: output, shape index: {}]
  %s19 = sld [smem:[#allocation0]]
  $region118: #{tpu_custom_call.1} parent=0
    _
  %s21 = ssub.s32 1, %s19
  %s22 = scalar_select 0, %s21, %s19
  $region1: #{tpu_custom_call.1} parent=0
    #allocation2 [shape = 'u8[8192]{0}', space=vmem, size = 0x2000, scoped, tag = 'input window, operand 0, single buffered']
    #allocation3 [shape = 's32[1]{0}', space=sflag, size = 0x4, scoped, tag = 'scoped memory for tpu_custom_call.1']
    #allocation4 [shape = 's32[1]{0}', space=sflag, size = 0x4, scoped, tag = 'scoped memory for tpu_custom_call.1']
    #allocation5 [shape = 'u8[8192]{0}', space=vmem, size = 0x2000, scoped, tag = 'input window, operand 1, single buffered']
    #allocation6 [shape = 's32[1]{0}', space=sflag, size = 0x4, scoped, tag = 'scoped memory for tpu_custom_call.1']
    #allocation7 [shape = 'u8[512]{0}', space=vmem, size = 0x400, scoped, tag = 'input window, operand 3, single buffered']
    #allocation8 [shape = 'u8[1024]{0}', space=vmem, size = 0x400, scoped, tag = 'input window, operand 5, single buffered']
    #allocation9 [shape = 's32[1]{0}', space=sflag, size = 0x4, scoped, tag = 'scoped memory for tpu_custom_call.1']
    #allocation10 [shape = 'u8[1024]{0}', space=vmem, size = 0x400, scoped, tag = 'input window, operand 7, single buffered']
    #allocation11 [shape = 'u8[1024]{0}', space=vmem, size = 0x400, scoped, tag = 'input window, operand 8, single buffered']
    #allocation12 [shape = 's32[1]{0}', space=sflag, size = 0x4, scoped, tag = 'scoped memory for tpu_custom_call.1']
    #allocation13 [shape = 'u8[1024]{0}', space=vmem, size = 0x400, scoped, tag = 'input window, operand 9, single buffered']
    #allocation14 [shape = 'u8[1024]{0}', space=vmem, size = 0x400, scoped, tag = 'input window, operand 11, single buffered']
    #allocation15 [shape = 's32[1]{0}', space=sflag, size = 0x4, scoped, tag = 'scoped memory for tpu_custom_call.1']
    #allocation16 [shape = 'u8[1024]{0}', space=vmem, size = 0x400, scoped, tag = 'input window, operand 13, single buffered']
    #allocation17 [shape = 'u8[8192]{0}', space=vmem, size = 0x2000, scoped, tag = 'output window, operand 0, single buffered']
    %23 = vsyncpa [#allocation3], 0
    %24 = vsyncpa [#allocation6], 0
    %25 = vsyncpa [#allocation9], 0
    %26 = vsyncpa [#allocation12], 0
    %27 = vsyncpa [#allocation15], 0
    %28 = vsyncpa [#allocation4], 0
    // Predicated region
    $region2: #{tpu_custom_call.1} parent=1 // pred_check
      _
    $region3: #{tpu_custom_call.1} parent=1 // pred_check_branch
      %30 = sbr.rel (0) target = $region5
    $region4: #{tpu_custom_call.1} parent=1 // pred_region
      %s32 = ssub.s32 256, 256
      %33 = vsyncadd [#allocation3], %s32
      %s34 = sshll.u32 [#allocation2], 4
      %s35 = int_to_ptr.vmem [resolvable:$true] %s34
      %40 = dma.hbm_to_vmem [thread:$0]  %s0, 256, %s35, [#allocation3], 128, 128, 8
    $region5: #{tpu_custom_call.1} parent=1 // pred_fallthru
      _
    // Predicated region
    $region6: #{tpu_custom_call.1} parent=1 // pred_check
      _
    $region7: #{tpu_custom_call.1} parent=1 // pred_check_branch
      %42 = sbr.rel (0) target = $region9
    $region8: #{tpu_custom_call.1} parent=1 // pred_region
      %s44 = ssub.s32 256, 256
      %45 = vsyncadd [#allocation6], %s44
      %s46 = sshll.u32 [#allocation5], 4
      %s47 = int_to_ptr.vmem [resolvable:$true] %s46
      %52 = dma.hbm_to_vmem [thread:$0]  %s1, 256, %s47, [#allocation6], 128, 128, 8
    $region9: #{tpu_custom_call.1} parent=1 // pred_fallthru
      _
    // Predicated region
    $region10: #{tpu_custom_call.1} parent=1 // pred_check
      _
    $region11: #{tpu_custom_call.1} parent=1 // pred_check_branch
      %54 = sbr.rel (0) target = $region13
    $region12: #{tpu_custom_call.1} parent=1 // pred_region
      _
    $region13: #{tpu_custom_call.1} parent=1 // pred_fallthru
      _
    // Predicated region
    $region14: #{tpu_custom_call.1} parent=1 // pred_check
      _
    $region15: #{tpu_custom_call.1} parent=1 // pred_check_branch
      %56 = sbr.rel (0) target = $region17
    $region16: #{tpu_custom_call.1} parent=1 // pred_region
      %s58 = ssub.s32 16, 16
      %59 = vsyncadd [#allocation6], %s58
      %s61 = sshll.u32 [#allocation7], 4
      %s62 = int_to_ptr.vmem [resolvable:$true] %s61
      %64 = dma.hbm_to_vmem [thread:$0]  %s3, 16, %s62, [#allocation6]
    $region17: #{tpu_custom_call.1} parent=1 // pred_fallthru
      _
    // Predicated region
    $region18: #{tpu_custom_call.1} parent=1 // pred_check
      _
    $region19: #{tpu_custom_call.1} parent=1 // pred_check_branch
      %66 = sbr.rel (0) target = $region21
    $region20: #{tpu_custom_call.1} parent=1 // pred_region
      _
    $region21: #{tpu_custom_call.1} parent=1 // pred_fallthru
      _
    // Predicated region
    $region22: #{tpu_custom_call.1} parent=1 // pred_check
      _
    $region23: #{tpu_custom_call.1} parent=1 // pred_check_branch
      %68 = sbr.rel (0) target = $region25
    $region24: #{tpu_custom_call.1} parent=1 // pred_region
      %s70 = ssub.s32 32, 32
      %71 = vsyncadd [#allocation9], %s70
      %s72 = sshll.u32 [#allocation8], 4
      %s73 = int_to_ptr.vmem [resolvable:$true] %s72
      %78 = dma.hbm_to_vmem [thread:$0]  %s5, 32, %s73, [#allocation9], 16, 16, 1
    $region25: #{tpu_custom_call.1} parent=1 // pred_fallthru
      _
    // Predicated region
    $region26: #{tpu_custom_call.1} parent=1 // pred_check
      _
    $region27: #{tpu_custom_call.1} parent=1 // pred_check_branch
      %80 = sbr.rel (0) target = $region29
    $region28: #{tpu_custom_call.1} parent=1 // pred_region
      _
    $region29: #{tpu_custom_call.1} parent=1 // pred_fallthru
      _
    // Predicated region
    $region30: #{tpu_custom_call.1} parent=1 // pred_check
      _
    $region31: #{tpu_custom_call.1} parent=1 // pred_check_branch
      %82 = sbr.rel (0) target = $region33
    $region32: #{tpu_custom_call.1} parent=1 // pred_region
      %s84 = ssub.s32 32, 32
      %85 = vsyncadd [#allocation9], %s84
      %s86 = sshll.u32 [#allocation10], 4
      %s87 = int_to_ptr.vmem [resolvable:$true] %s86
      %92 = dma.hbm_to_vmem [thread:$0]  %s7, 32, %s87, [#allocation9], 16, 16, 1
    $region33: #{tpu_custom_call.1} parent=1 // pred_fallthru
      _
    // Predicated region
    $region34: #{tpu_custom_call.1} parent=1 // pred_check
      _
    $region35: #{tpu_custom_call.1} parent=1 // pred_check_branch
      %94 = sbr.rel (0) target = $region37
    $region36: #{tpu_custom_call.1} parent=1 // pred_region
      %s96 = ssub.s32 32, 32
      %97 = vsyncadd [#allocation12], %s96
      %s98 = sshll.u32 [#allocation11], 4
      %s99 = int_to_ptr.vmem [resolvable:$true] %s98
      %104 = dma.hbm_to_vmem [thread:$0]  %s8, 32, %s99, [#allocation12], 16, 16, 1
    $region37: #{tpu_custom_call.1} parent=1 // pred_fallthru
      _
    // Predicated region
    $region38: #{tpu_custom_call.1} parent=1 // pred_check
      _
    $region39: #{tpu_custom_call.1} parent=1 // pred_check_branch
      %106 = sbr.rel (0) target = $region41
    $region40: #{tpu_custom_call.1} parent=1 // pred_region
      %s108 = ssub.s32 32, 32
      %109 = vsyncadd [#allocation12], %s108
      %s110 = sshll.u32 [#allocation13], 4
      %s111 = int_to_ptr.vmem [resolvable:$true] %s110
      %116 = dma.hbm_to_vmem [thread:$0]  %s9, 32, %s111, [#allocation12], 16, 16, 1
    $region41: #{tpu_custom_call.1} parent=1 // pred_fallthru
      _
    // Predicated region
    $region42: #{tpu_custom_call.1} parent=1 // pred_check
      _
    $region43: #{tpu_custom_call.1} parent=1 // pred_check_branch
      %118 = sbr.rel (0) target = $region45
    $region44: #{tpu_custom_call.1} parent=1 // pred_region
      _
    $region45: #{tpu_custom_call.1} parent=1 // pred_fallthru
      _
    // Predicated region
    $region46: #{tpu_custom_call.1} parent=1 // pred_check
      _
    $region47: #{tpu_custom_call.1} parent=1 // pred_check_branch
      %120 = sbr.rel (0) target = $region49
    $region48: #{tpu_custom_call.1} parent=1 // pred_region
      %s122 = ssub.s32 32, 32
      %123 = vsyncadd [#allocation15], %s122
      %s124 = sshll.u32 [#allocation14], 4
      %s125 = int_to_ptr.vmem [resolvable:$true] %s124
      %130 = dma.hbm_to_vmem [thread:$0]  %s11, 32, %s125, [#allocation15], 16, 16, 1
    $region49: #{tpu_custom_call.1} parent=1 // pred_fallthru
      _
    // Predicated region
    $region50: #{tpu_custom_call.1} parent=1 // pred_check
      _
    $region51: #{tpu_custom_call.1} parent=1 // pred_check_branch
      %132 = sbr.rel (0) target = $region53
    $region52: #{tpu_custom_call.1} parent=1 // pred_region
      _
    $region53: #{tpu_custom_call.1} parent=1 // pred_fallthru
      _
    // Predicated region
    $region54: #{tpu_custom_call.1} parent=1 // pred_check
      _
    $region55: #{tpu_custom_call.1} parent=1 // pred_check_branch
      %134 = sbr.rel (0) target = $region57
    $region56: #{tpu_custom_call.1} parent=1 // pred_region
      %s136 = ssub.s32 32, 32
      %137 = vsyncadd [#allocation15], %s136
      %s138 = sshll.u32 [#allocation16], 4
      %s139 = int_to_ptr.vmem [resolvable:$true] %s138
      %144 = dma.hbm_to_vmem [thread:$0]  %s13, 32, %s139, [#allocation15], 16, 16, 1
    $region57: #{tpu_custom_call.1} parent=1 // pred_fallthru
      _
    // Predicated region
    $region58: #{tpu_custom_call.1} parent=1 // pred_check
      _
    $region59: #{tpu_custom_call.1} parent=1 // pred_check_branch
      %146 = sbr.rel (0) target = $region61
    $region60: #{tpu_custom_call.1} parent=1 // pred_region
      _
    $region61: #{tpu_custom_call.1} parent=1 // pred_fallthru
      _
    // Predicated region
    $region62: #{tpu_custom_call.1} parent=1 // pred_check
      _
    $region63: #{tpu_custom_call.1} parent=1 // pred_check_branch
      %148 = sbr.rel (0) target = $region65
    $region64: #{tpu_custom_call.1} parent=1 // pred_region
      _
    $region65: #{tpu_custom_call.1} parent=1 // pred_fallthru
      _
    // Predicated region
    $region66: #{tpu_custom_call.1} parent=1 // pred_check
      _
    $region67: #{tpu_custom_call.1} parent=1 // pred_check_branch
      %150 = sbr.rel (0) target = $region69
    $region68: #{tpu_custom_call.1} parent=1 // pred_region
      _
    $region69: #{tpu_custom_call.1} parent=1 // pred_fallthru
      _
    // Predicated region
    $region70: #{tpu_custom_call.1} parent=1 // pred_check
      _
    $region71: #{tpu_custom_call.1} parent=1 // pred_check_branch
      %152 = sbr.rel (0) target = $region73
    $region72: #{tpu_custom_call.1} parent=1 // pred_region
      _
    $region73: #{tpu_custom_call.1} parent=1 // pred_fallthru
      _
    // Predicated region
    $region74: #{tpu_custom_call.1} parent=1 // pred_check
      _
    $region75: #{tpu_custom_call.1} parent=1 // pred_check_branch
      %154 = sbr.rel (0) target = $region77
    $region76: #{tpu_custom_call.1} parent=1 // pred_region
      %155 = dma.done [#allocation3], 256
    $region77: #{tpu_custom_call.1} parent=1 // pred_fallthru
      _
    // Predicated region
    $region78: #{tpu_custom_call.1} parent=1 // pred_check
      _
    $region79: #{tpu_custom_call.1} parent=1 // pred_check_branch
      %157 = sbr.rel (0) target = $region81
    $region80: #{tpu_custom_call.1} parent=1 // pred_region
      %158 = dma.done [#allocation6], 256
    $region81: #{tpu_custom_call.1} parent=1 // pred_fallthru
      _
    // Predicated region
    $region82: #{tpu_custom_call.1} parent=1 // pred_check
      _
    $region83: #{tpu_custom_call.1} parent=1 // pred_check_branch
      %160 = sbr.rel (0) target = $region85
    $region84: #{tpu_custom_call.1} parent=1 // pred_region
      %161 = dma.done [#allocation6], 16
    $region85: #{tpu_custom_call.1} parent=1 // pred_fallthru
      _
    // Predicated region
    $region86: #{tpu_custom_call.1} parent=1 // pred_check
      _
    $region87: #{tpu_custom_call.1} parent=1 // pred_check_branch
      %163 = sbr.rel (0) target = $region89
    $region88: #{tpu_custom_call.1} parent=1 // pred_region
      %164 = dma.done [#allocation9], 32
    $region89: #{tpu_custom_call.1} parent=1 // pred_fallthru
      _
    // Predicated region
    $region90: #{tpu_custom_call.1} parent=1 // pred_check
      _
    $region91: #{tpu_custom_call.1} parent=1 // pred_check_branch
      %166 = sbr.rel (0) target = $region93
    $region92: #{tpu_custom_call.1} parent=1 // pred_region
      %167 = dma.done [#allocation9], 32
    $region93: #{tpu_custom_call.1} parent=1 // pred_fallthru
      _
    // Predicated region
    $region94: #{tpu_custom_call.1} parent=1 // pred_check
      _
    $region95: #{tpu_custom_call.1} parent=1 // pred_check_branch
      %169 = sbr.rel (0) target = $region97
    $region96: #{tpu_custom_call.1} parent=1 // pred_region
      %170 = dma.done [#allocation12], 32
    $region97: #{tpu_custom_call.1} parent=1 // pred_fallthru
      _
    // Predicated region
    $region98: #{tpu_custom_call.1} parent=1 // pred_check
      _
    $region99: #{tpu_custom_call.1} parent=1 // pred_check_branch
      %172 = sbr.rel (0) target = $region101
    $region100: #{tpu_custom_call.1} parent=1 // pred_region
      %173 = dma.done [#allocation12], 32
    $region101: #{tpu_custom_call.1} parent=1 // pred_fallthru
      _
    // Predicated region
    $region102: #{tpu_custom_call.1} parent=1 // pred_check
      _
    $region103: #{tpu_custom_call.1} parent=1 // pred_check_branch
      %175 = sbr.rel (0) target = $region105
    $region104: #{tpu_custom_call.1} parent=1 // pred_region
      %176 = dma.done [#allocation15], 32
    $region105: #{tpu_custom_call.1} parent=1 // pred_fallthru
      _
    // Predicated region
    $region106: #{tpu_custom_call.1} parent=1 // pred_check
      _
    $region107: #{tpu_custom_call.1} parent=1 // pred_check_branch
      %178 = sbr.rel (0) target = $region109
    $region108: #{tpu_custom_call.1} parent=1 // pred_region
      %179 = dma.done [#allocation15], 32
    $region109: #{tpu_custom_call.1} parent=1 // pred_fallthru
      _
    %v181 = vld [vmem:[#allocation2] sm:$0xff]
    %v182 = vld [vmem:[#allocation2 + $0x8] sm:$0xff]
    %v183 = vld [vmem:[%s2] sm:$0x1]
    %v184 = vld [vmem:[#allocation7] sm:$0x1]
    %vm185 = vcmask 261120
    %v186 = vsel %vm185, %v181, 0.0
    %187 = vadd.xlane.f32.xlu0 %v186
    %v188 = vpop.xlane.xlu0 %187
    %v189 = vsel %vm185, %v182, 0.0
    %190 = vadd.xlane.f32.xlu0 %v189
    %v191 = vpop.xlane.xlu0 %190
    %v192 = vrcp.pop 32.0
    %v193 = vmul.f32 %v188, %v192
    %v194 = vmul.f32 %v191, %v192
    %v195 = vsub.f32 %v181, %v193
    %v196 = vsub.f32 %v182, %v194
    %v197 = vmul.f32 %v195, %v195
    %v198 = vmul.f32 %v196, %v196
    %v199 = vsel %vm185, %v197, 0.0
    %200 = vadd.xlane.f32.xlu0 %v199
    %v201 = vpop.xlane.xlu0 %200
    %v202 = vsel %vm185, %v198, 0.0
    %203 = vadd.xlane.f32.xlu0 %v202
    %v204 = vpop.xlane.xlu0 %203
    %v205 = vmul.f32 %v201, %v192
    %v206 = vmul.f32 %v204, %v192
    %v207 = vadd.f32 %v205, 1e-12
    %v208 = vadd.f32 %v206, 1e-12
    %v209 = vrsqrt.pop %v207
    %v210 = vrsqrt.pop %v208
    %v211 = vmul.f32 %v195, %v209
    %v212 = vmul.f32 %v196, %v210
    %v214 = vlaneseq
    %v215 = vshrl.u32 %v214, 7
    %v216 = vsub.s32 0, %v215
    %v217 = vrot.slane %v183, %v216
    %v219 = vmul.f32 %v211, %v217
    %v220 = vmul.f32 %v212, %v217
    %v222 = vlaneseq
    %v223 = vshrl.u32 %v222, 7
    %v224 = vsub.s32 0, %v223
    %v225 = vrot.slane %v184, %v224
    %v227 = vadd.f32 %v219, %v225
    %v228 = vadd.f32 %v220, %v225
    %v229 = vld [vmem:[#allocation5] sm:$0xff]
    %v230 = vld [vmem:[#allocation5 + $0x8] sm:$0xff]
    %v231 = vlaneseq
    %v232 = vand.u32 %v231, 127
    %vm233 = vcmp.ge.s32.totalorder %v232, 0
    %vm234 = vcmp.lt.s32.totalorder %v232, 8
    %vm235 = vmand %vm233, %vm234
    %v236 = vsel %vm235, 1, 0
    %v237 = vcvt.s32.f32 %v236
    %vm238 = vcmp.ge.s32.totalorder %v232, 8
    %vm239 = vcmp.lt.s32.totalorder %v232, 16
    %vm240 = vmand %vm238, %vm239
    %v241 = vsel %vm240, 1, 0
    %v242 = vcvt.s32.f32 %v241
    %vm243 = vcmp.ge.s32.totalorder %v232, 16
    %vm244 = vcmp.lt.s32.totalorder %v232, 24
    %vm245 = vmand %vm243, %vm244
    %v246 = vsel %vm245, 1, 0
    %v247 = vcvt.s32.f32 %v246
    %vm248 = vcmp.ge.s32.totalorder %v232, 24
    %vm249 = vcmp.lt.s32.totalorder %v232, 32
    %vm250 = vmand %vm248, %vm249
    %v251 = vsel %vm250, 1, 0
    %v252 = vcvt.s32.f32 %v251
    %v253 = vpack.c.bf16 %v228, %v227
    %v254 = vld [vmem:[%s4] sm:$0xf]
    %v255 = vld [vmem:[%s4 + $0x4] sm:$0xf]
    %v256 = vld [vmem:[%s4 + $0x8] sm:$0xf]
    %v257 = vld [vmem:[%s4 + $0xc] sm:$0xf]
    %v258 = vld [vmem:[#allocation8] sm:$0x1]
    %v260 = vlaneseq
    %v261 = vshrl.u32 %v260, 7
    %v262 = vsub.s32 0, %v261
    %v263 = vrot.slane %v258, %v262
    %v269 = vunpack.c.l.b16 %v254
    %v270 = vunpack.c.l.b16 %v255
    %v271 = vunpack.c.l.b16 %v256
    %v272 = vunpack.c.l.b16 %v257
    %v273 = vpack.c.b16 %v270, %v269
    %v274 = vpack.c.b16 %v272, %v271
    %v278 = vsel %vm185, %v253, 0
    %280 = vmatprep.subr.bf16.mxu0 0
    %281 = vmatpush1.bf16.msra.mxu0 %v273
    %282 = vmatprep.subr.bf16.mxu0 0
    %283 = vmatpush1.bf16.msra.mxu0 %v274
    %284 = vmatprep.subr.bf16.mxu0 0
    %285 = vmatpush1.bf16.msra.mxu0 0
    %286 = vmatprep.subr.bf16.mxu0 0
    %287 = vmatpush1.bf16.msra.mxu0 0
    %288 = vmatprep.subr.bf16.mxu0 0
    %289 = vmatpush1.bf16.msra.mxu0 0
    %290 = vmatprep.subr.bf16.mxu0 0
    %291 = vmatpush1.bf16.msra.mxu0 0
    %292 = vmatprep.subr.bf16.mxu0 0
    %293 = vmatpush1.bf16.msra.mxu0 0
    %294 = vmatprep.subr.bf16.mxu0 0
    %295 = vmatpush1.bf16.msra.mxu0 0
    %296 = vmatprep.subr.bf16.mxu0 0
    %297 = vmatpush1.bf16.msra.mxu0 0
    %298 = vmatprep.subr.bf16.mxu0 0
    %299 = vmatpush1.bf16.msra.mxu0 0
    %300 = vmatprep.subr.bf16.mxu0 0
    %301 = vmatpush1.bf16.msra.mxu0 0
    %302 = vmatprep.subr.bf16.mxu0 0
    %303 = vmatpush1.bf16.msra.mxu0 0
    %304 = vmatprep.subr.bf16.mxu0 0
    %305 = vmatpush1.bf16.msra.mxu0 0
    %306 = vmatprep.subr.bf16.mxu0 0
    %307 = vmatpush1.bf16.msra.mxu0 0
    %308 = vmatprep.subr.bf16.mxu0 0
    %309 = vmatpush1.bf16.msra.mxu0 0
    %310 = vmatprep.subr.bf16.mxu0 0
    %311 = vmatpush1.bf16.msra.mxu0 0
    %312 = vmatprep.mubr.bf16.mxu0 0
    %313 = vmatmul.mubr.bf16.gmra.mrb[0].mxu0 %v278
    %v314 = vpop.f32.mrb[0].mxu0
    %v315 = vadd.f32 %v263, %v314
    %v316 = vpop.f32.mrb[0].mxu0
    %v317 = vpop.f32.mrb[0].mxu0
    %v318 = vadd.f32 %v263, %v317
    %v319 = vpop.f32.mrb[0].mxu0
    %320 = vdwg.mxu0
    %v321 = vpack.c.bf16 %v318, %v315
    %v322 = vmul.f32 %v315, %v237
    %v323 = vmul.f32 %v318, %v237
    %v324 = vmul.f32 %v315, %v242
    %v325 = vmul.f32 %v318, %v242
    %v326 = vmul.f32 %v315, %v247
    %v327 = vmul.f32 %v318, %v247
    %v328 = vmul.f32 %v315, %v252
    %v329 = vmul.f32 %v318, %v252
    %v330 = vpack.c.bf16 %v323, %v322
    %v331 = vpack.c.bf16 %v325, %v324
    %v332 = vpack.c.bf16 %v327, %v326
    %v333 = vpack.c.bf16 %v329, %v328
    %335 = vrot.lane.b32.xlu0 %v321, 96
    %v336 = vpop.permute.xlu0 %335
    %v338 = vsel %vm185, %v330, 0
    %v341 = vsel %vm185, %v331, 0
    %v344 = vsel %vm185, %v332, 0
    %v347 = vsel %vm185, %v333, 0
    %v350 = vsel %vm185, %v336, 0
    %352 = vmatprep.subr.bf16.mxu0 0
    %353 = vmatpush1.bf16.xpose.msra.mxu0 %v350
    %354 = vmatprep.subr.bf16.mxu0 0
    %355 = vmatpush1.bf16.xpose.msra.mxu0 0
    %356 = vmatprep.subr.bf16.mxu0 0
    %357 = vmatpush1.bf16.xpose.msra.mxu0 0
    %358 = vmatprep.subr.bf16.mxu0 0
    %359 = vmatpush1.bf16.xpose.msra.mxu0 0
    %360 = vmatprep.subr.bf16.mxu0 0
    %361 = vmatpush1.bf16.xpose.msra.mxu0 0
    %362 = vmatprep.subr.bf16.mxu0 0
    %363 = vmatpush1.bf16.xpose.msra.mxu0 0
    %364 = vmatprep.subr.bf16.mxu0 0
    %365 = vmatpush1.bf16.xpose.msra.mxu0 0
    %366 = vmatprep.subr.bf16.mxu0 0
    %367 = vmatpush1.bf16.xpose.msra.mxu0 0
    %368 = vmatprep.subr.bf16.mxu0 0
    %369 = vmatpush1.bf16.xpose.msra.mxu0 0
    %370 = vmatprep.subr.bf16.mxu0 0
    %371 = vmatpush1.bf16.xpose.msra.mxu0 0
    %372 = vmatprep.subr.bf16.mxu0 0
    %373 = vmatpush1.bf16.xpose.msra.mxu0 0
    %374 = vmatprep.subr.bf16.mxu0 0
    %375 = vmatpush1.bf16.xpose.msra.mxu0 0
    %376 = vmatprep.subr.bf16.mxu0 0
    %377 = vmatpush1.bf16.xpose.msra.mxu0 0
    %378 = vmatprep.subr.bf16.mxu0 0
    %379 = vmatpush1.bf16.xpose.msra.mxu0 0
    %380 = vmatprep.subr.bf16.mxu0 0
    %381 = vmatpush1.bf16.xpose.msra.mxu0 0
    %382 = vmatprep.subr.bf16.mxu0 0
    %383 = vmatpush1.bf16.xpose.msra.mxu0 0
    %384 = vmatprep.mubr.bf16.mxu0 0
    %385 = vmatmul.mubr.bf16.gmra.mrb[0].mxu0 %v338
    %v386 = vpop.f32.mrb[0].mxu0
    %v387 = vadd.f32 %v229, %v386
    %v388 = vpop.f32.mrb[0].mxu0
    %v389 = vpop.f32.mrb[0].mxu0
    %v390 = vadd.f32 %v230, %v389
    %v391 = vpop.f32.mrb[0].mxu0
    %392 = vmatprep.mubr.bf16.mxu0 0
    %393 = vmatmul.mubr.bf16.gmra.mrb[0].mxu0 %v341
    %v394 = vpop.f32.mrb[0].mxu0
    %v395 = vadd.f32 %v229, %v394
    %v396 = vpop.f32.mrb[0].mxu0
    %v397 = vpop.f32.mrb[0].mxu0
    %v398 = vadd.f32 %v230, %v397
    %v399 = vpop.f32.mrb[0].mxu0
    %400 = vmatprep.mubr.bf16.mxu0 0
    %401 = vmatmul.mubr.bf16.gmra.mrb[0].mxu0 %v344
    %v402 = vpop.f32.mrb[0].mxu0
    %v403 = vadd.f32 %v229, %v402
    %v404 = vpop.f32.mrb[0].mxu0
    %v405 = vpop.f32.mrb[0].mxu0
    %v406 = vadd.f32 %v230, %v405
    %v407 = vpop.f32.mrb[0].mxu0
    %408 = vmatprep.mubr.bf16.mxu0 0
    %409 = vmatmul.mubr.bf16.gmra.mrb[0].mxu0 %v347
    %v410 = vpop.f32.mrb[0].mxu0
    %v411 = vadd.f32 %v229, %v410
    %v412 = vpop.f32.mrb[0].mxu0
    %v413 = vpop.f32.mrb[0].mxu0
    %v414 = vadd.f32 %v230, %v413
    %v415 = vpop.f32.mrb[0].mxu0
    %416 = vdwg.mxu0
    %vm417 = vcmask 130048
    %v418 = vsel %vm417, %v387, -inf
    %419 = vmax.xlane.f32.xlu0 %v418
    %v420 = vpop.xlane.xlu0 %419
    %v421 = vsel %vm417, %v390, -inf
    %422 = vmax.xlane.f32.xlu0 %v421
    %v423 = vpop.xlane.xlu0 %422
    %v424 = vsel %vm417, %v395, -inf
    %425 = vmax.xlane.f32.xlu0 %v424
    %v426 = vpop.xlane.xlu0 %425
    %v427 = vsel %vm417, %v398, -inf
    %428 = vmax.xlane.f32.xlu0 %v427
    %v429 = vpop.xlane.xlu0 %428
    %v430 = vsel %vm417, %v403, -inf
    %431 = vmax.xlane.f32.xlu0 %v430
    %v432 = vpop.xlane.xlu0 %431
    %v433 = vsel %vm417, %v406, -inf
    %434 = vmax.xlane.f32.xlu0 %v433
    %v435 = vpop.xlane.xlu0 %434
    %v436 = vsel %vm417, %v411, -inf
    %437 = vmax.xlane.f32.xlu0 %v436
    %v438 = vpop.xlane.xlu0 %437
    %v439 = vsel %vm417, %v414, -inf
    %440 = vmax.xlane.f32.xlu0 %v439
    %v441 = vpop.xlane.xlu0 %440
    %v442 = vsub.f32 %v387, %v420
    %v443 = vsub.f32 %v390, %v423
    %v444 = vsub.f32 %v395, %v426
    %v445 = vsub.f32 %v398, %v429
    %v446 = vsub.f32 %v403, %v432
    %v447 = vsub.f32 %v406, %v435
    %v448 = vsub.f32 %v411, %v438
    %v449 = vsub.f32 %v414, %v441
    %v450 = vmul.f32 %v442, 1.442695
    %v451 = vpow.pop %v450
    %v452 = vmul.f32 %v443, 1.442695
    %v453 = vpow.pop %v452
    %v454 = vmul.f32 %v444, 1.442695
    %v455 = vpow.pop %v454
    %v456 = vmul.f32 %v445, 1.442695
    %v457 = vpow.pop %v456
    %v458 = vmul.f32 %v446, 1.442695
    %v459 = vpow.pop %v458
    %v460 = vmul.f32 %v447, 1.442695
    %v461 = vpow.pop %v460
    %v462 = vmul.f32 %v448, 1.442695
    %v463 = vpow.pop %v462
    %v464 = vmul.f32 %v449, 1.442695
    %v465 = vpow.pop %v464
    %v466 = vsel %vm417, %v451, 0.0
    %467 = vadd.xlane.f32.xlu0 %v466
    %v468 = vpop.xlane.xlu0 %467
    %v469 = vsel %vm417, %v453, 0.0
    %470 = vadd.xlane.f32.xlu0 %v469
    %v471 = vpop.xlane.xlu0 %470
    %v472 = vsel %vm417, %v455, 0.0
    %473 = vadd.xlane.f32.xlu0 %v472
    %v474 = vpop.xlane.xlu0 %473
    %v475 = vsel %vm417, %v457, 0.0
    %476 = vadd.xlane.f32.xlu0 %v475
    %v477 = vpop.xlane.xlu0 %476
    %v478 = vsel %vm417, %v459, 0.0
    %479 = vadd.xlane.f32.xlu0 %v478
    %v480 = vpop.xlane.xlu0 %479
    %v481 = vsel %vm417, %v461, 0.0
    %482 = vadd.xlane.f32.xlu0 %v481
    %v483 = vpop.xlane.xlu0 %482
    %v484 = vsel %vm417, %v463, 0.0
    %485 = vadd.xlane.f32.xlu0 %v484
    %v486 = vpop.xlane.xlu0 %485
    %v487 = vsel %vm417, %v465, 0.0
    %488 = vadd.xlane.f32.xlu0 %v487
    %v489 = vpop.xlane.xlu0 %488
    %v490 = vrcp.pop %v468
    %v491 = vrcp.pop %v471
    %v492 = vrcp.pop %v474
    %v493 = vrcp.pop %v477
    %v494 = vrcp.pop %v480
    %v495 = vrcp.pop %v483
    %v496 = vrcp.pop %v486
    %v497 = vrcp.pop %v489
    %v498 = vmul.f32 %v451, %v490
    %v499 = vmul.f32 %v453, %v491
    %v500 = vmul.f32 %v455, %v492
    %v501 = vmul.f32 %v457, %v493
    %v502 = vmul.f32 %v459, %v494
    %v503 = vmul.f32 %v461, %v495
    %v504 = vmul.f32 %v463, %v496
    %v505 = vmul.f32 %v465, %v497
    %v506 = vpack.c.bf16 %v499, %v498
    %v507 = vpack.c.bf16 %v501, %v500
    %v508 = vpack.c.bf16 %v503, %v502
    %v509 = vpack.c.bf16 %v505, %v504
    %510 = vrot.lane.b32.xlu0 %v321, 64
    %v511 = vpop.permute.xlu0 %510
    %v514 = vsel %vm417, %v506, 0
    %v517 = vsel %vm417, %v507, 0
    %v520 = vsel %vm417, %v508, 0
    %v523 = vsel %vm417, %v509, 0
    %525 = vmatprep.subr.bf16.mxu0 0
    %526 = vmatpush1.bf16.msra.mxu0 %v511
    %527 = vmatprep.subr.bf16.mxu0 0
    %528 = vmatpush1.bf16.msra.mxu0 0
    %529 = vmatprep.subr.bf16.mxu0 0
    %530 = vmatpush1.bf16.msra.mxu0 0
    %531 = vmatprep.subr.bf16.mxu0 0
    %532 = vmatpush1.bf16.msra.mxu0 0
    %533 = vmatprep.subr.bf16.mxu0 0
    %534 = vmatpush1.bf16.msra.mxu0 0
    %535 = vmatprep.subr.bf16.mxu0 0
    %536 = vmatpush1.bf16.msra.mxu0 0
    %537 = vmatprep.subr.bf16.mxu0 0
    %538 = vmatpush1.bf16.msra.mxu0 0
    %539 = vmatprep.subr.bf16.mxu0 0
    %540 = vmatpush1.bf16.msra.mxu0 0
    %541 = vmatprep.subr.bf16.mxu0 0
    %542 = vmatpush1.bf16.msra.mxu0 0
    %543 = vmatprep.subr.bf16.mxu0 0
    %544 = vmatpush1.bf16.msra.mxu0 0
    %545 = vmatprep.subr.bf16.mxu0 0
    %546 = vmatpush1.bf16.msra.mxu0 0
    %547 = vmatprep.subr.bf16.mxu0 0
    %548 = vmatpush1.bf16.msra.mxu0 0
    %549 = vmatprep.subr.bf16.mxu0 0
    %550 = vmatpush1.bf16.msra.mxu0 0
    %551 = vmatprep.subr.bf16.mxu0 0
    %552 = vmatpush1.bf16.msra.mxu0 0
    %553 = vmatprep.subr.bf16.mxu0 0
    %554 = vmatpush1.bf16.msra.mxu0 0
    %555 = vmatprep.subr.bf16.mxu0 0
    %556 = vmatpush1.bf16.msra.mxu0 0
    %557 = vmatprep.mubr.bf16.mxu0 0
    %558 = vmatmul.mubr.bf16.gmra.mrb[0].mxu0 %v514
    %v559 = vpop.f32.mrb[0].mxu0
    %v560 = vadd.f32 0.0, %v559
    %v561 = vpop.f32.mrb[0].mxu0
    %v562 = vpop.f32.mrb[0].mxu0
    %v563 = vadd.f32 0.0, %v562
    %v564 = vpop.f32.mrb[0].mxu0
    %565 = vmatprep.mubr.bf16.mxu0 0
    %566 = vmatmul.mubr.bf16.gmra.mrb[0].mxu0 %v517
    %v567 = vpop.f32.mrb[0].mxu0
    %v568 = vadd.f32 0.0, %v567
    %v569 = vpop.f32.mrb[0].mxu0
    %v570 = vpop.f32.mrb[0].mxu0
    %v571 = vadd.f32 0.0, %v570
    %v572 = vpop.f32.mrb[0].mxu0
    %573 = vmatprep.mubr.bf16.mxu0 0
    %574 = vmatmul.mubr.bf16.gmra.mrb[0].mxu0 %v520
    %v575 = vpop.f32.mrb[0].mxu0
    %v576 = vadd.f32 0.0, %v575
    %v577 = vpop.f32.mrb[0].mxu0
    %v578 = vpop.f32.mrb[0].mxu0
    %v579 = vadd.f32 0.0, %v578
    %v580 = vpop.f32.mrb[0].mxu0
    %581 = vmatprep.mubr.bf16.mxu0 0
    %582 = vmatmul.mubr.bf16.gmra.mrb[0].mxu0 %v523
    %v583 = vpop.f32.mrb[0].mxu0
    %v584 = vadd.f32 0.0, %v583
    %v585 = vpop.f32.mrb[0].mxu0
    %v586 = vpop.f32.mrb[0].mxu0
    %v587 = vadd.f32 0.0, %v586
    %v588 = vpop.f32.mrb[0].mxu0
    %589 = vdwg.mxu0
    %v590 = vmul.f32 %v237, %v560
    %v591 = vmul.f32 %v237, %v563
    %v592 = vmul.f32 %v242, %v568
    %v593 = vmul.f32 %v242, %v571
    %v594 = vadd.f32 %v590, %v592
    %v595 = vadd.f32 %v591, %v593
    %v596 = vmul.f32 %v247, %v576
    %v597 = vmul.f32 %v247, %v579
    %v598 = vadd.f32 %v594, %v596
    %v599 = vadd.f32 %v595, %v597
    %v600 = vmul.f32 %v252, %v584
    %v601 = vmul.f32 %v252, %v587
    %v602 = vadd.f32 %v598, %v600
    %v603 = vadd.f32 %v599, %v601
    %v604 = vpack.c.bf16 %v603, %v602
    %v605 = vld [vmem:[%s6] sm:$0xf]
    %v606 = vld [vmem:[%s6 + $0x4] sm:$0xf]
    %v607 = vld [vmem:[%s6 + $0x8] sm:$0xf]
    %v608 = vld [vmem:[%s6 + $0xc] sm:$0xf]
    %v609 = vld [vmem:[#allocation10] sm:$0x1]
    %v611 = vlaneseq
    %v612 = vshrl.u32 %v611, 7
    %v613 = vsub.s32 0, %v612
    %v614 = vrot.slane %v609, %v613
    %v620 = vunpack.c.l.b16 %v605
    %v621 = vunpack.c.l.b16 %v606
    %v622 = vunpack.c.l.b16 %v607
    %v623 = vunpack.c.l.b16 %v608
    %v624 = vpack.c.b16 %v621, %v620
    %v625 = vpack.c.b16 %v623, %v622
    %v629 = vsel %vm185, %v604, 0
    %631 = vmatprep.subr.bf16.mxu0 0
    %632 = vmatpush1.bf16.msra.mxu0 %v624
    %633 = vmatprep.subr.bf16.mxu0 0
    %634 = vmatpush1.bf16.msra.mxu0 %v625
    %635 = vmatprep.subr.bf16.mxu0 0
    %636 = vmatpush1.bf16.msra.mxu0 0
    %637 = vmatprep.subr.bf16.mxu0 0
    %638 = vmatpush1.bf16.msra.mxu0 0
    %639 = vmatprep.subr.bf16.mxu0 0
    %640 = vmatpush1.bf16.msra.mxu0 0
    %641 = vmatprep.subr.bf16.mxu0 0
    %642 = vmatpush1.bf16.msra.mxu0 0
    %643 = vmatprep.subr.bf16.mxu0 0
    %644 = vmatpush1.bf16.msra.mxu0 0
    %645 = vmatprep.subr.bf16.mxu0 0
    %646 = vmatpush1.bf16.msra.mxu0 0
    %647 = vmatprep.subr.bf16.mxu0 0
    %648 = vmatpush1.bf16.msra.mxu0 0
    %649 = vmatprep.subr.bf16.mxu0 0
    %650 = vmatpush1.bf16.msra.mxu0 0
    %651 = vmatprep.subr.bf16.mxu0 0
    %652 = vmatpush1.bf16.msra.mxu0 0
    %653 = vmatprep.subr.bf16.mxu0 0
    %654 = vmatpush1.bf16.msra.mxu0 0
    %655 = vmatprep.subr.bf16.mxu0 0
    %656 = vmatpush1.bf16.msra.mxu0 0
    %657 = vmatprep.subr.bf16.mxu0 0
    %658 = vmatpush1.bf16.msra.mxu0 0
    %659 = vmatprep.subr.bf16.mxu0 0
    %660 = vmatpush1.bf16.msra.mxu0 0
    %661 = vmatprep.subr.bf16.mxu0 0
    %662 = vmatpush1.bf16.msra.mxu0 0
    %663 = vmatprep.mubr.bf16.mxu0 0
    %664 = vmatmul.mubr.bf16.gmra.mrb[0].mxu0 %v629
    %v665 = vpop.f32.mrb[0].mxu0
    %v666 = vadd.f32 %v614, %v665
    %v667 = vpop.f32.mrb[0].mxu0
    %v668 = vpop.f32.mrb[0].mxu0
    %v669 = vadd.f32 %v614, %v668
    %v670 = vpop.f32.mrb[0].mxu0
    %671 = vdwg.mxu0
    %v672 = vadd.f32 %v666, %v227
    %v673 = vadd.f32 %v669, %v228
    %v674 = vld [vmem:[#allocation11] sm:$0x1]
    %v675 = vld [vmem:[#allocation13] sm:$0x1]
    %v676 = vsel %vm185, %v672, 0.0
    %677 = vadd.xlane.f32.xlu0 %v676
    %v678 = vpop.xlane.xlu0 %677
    %v679 = vsel %vm185, %v673, 0.0
    %680 = vadd.xlane.f32.xlu0 %v679
    %v681 = vpop.xlane.xlu0 %680
    %v682 = vmul.f32 %v678, %v192
    %v683 = vmul.f32 %v681, %v192
    %v684 = vsub.f32 %v672, %v682
    %v685 = vsub.f32 %v673, %v683
    %v686 = vmul.f32 %v684, %v684
    %v687 = vmul.f32 %v685, %v685
    %v688 = vsel %vm185, %v686, 0.0
    %689 = vadd.xlane.f32.xlu0 %v688
    %v690 = vpop.xlane.xlu0 %689
    %v691 = vsel %vm185, %v687, 0.0
    %692 = vadd.xlane.f32.xlu0 %v691
    %v693 = vpop.xlane.xlu0 %692
    %v694 = vmul.f32 %v690, %v192
    %v695 = vmul.f32 %v693, %v192
    %v696 = vadd.f32 %v694, 1e-12
    %v697 = vadd.f32 %v695, 1e-12
    %v698 = vrsqrt.pop %v696
    %v699 = vrsqrt.pop %v697
    %v700 = vmul.f32 %v684, %v698
    %v701 = vmul.f32 %v685, %v699
    %v703 = vlaneseq
    %v704 = vshrl.u32 %v703, 7
    %v705 = vsub.s32 0, %v704
    %v706 = vrot.slane %v674, %v705
    %v708 = vmul.f32 %v700, %v706
    %v709 = vmul.f32 %v701, %v706
    %v711 = vlaneseq
    %v712 = vshrl.u32 %v711, 7
    %v713 = vsub.s32 0, %v712
    %v714 = vrot.slane %v675, %v713
    %v716 = vadd.f32 %v708, %v714
    %v717 = vadd.f32 %v709, %v714
    %v718 = vpack.c.bf16 %v717, %v716
    %v719 = vld [vmem:[%s10] sm:$0xf]
    %v720 = vld [vmem:[%s10 + $0x4] sm:$0xf]
    %v721 = vld [vmem:[%s10 + $0x8] sm:$0xf]
    %v722 = vld [vmem:[%s10 + $0xc] sm:$0xf]
    %v723 = vld [vmem:[#allocation14] sm:$0x1]
    %v725 = vlaneseq
    %v726 = vshrl.u32 %v725, 7
    %v727 = vsub.s32 0, %v726
    %v728 = vrot.slane %v723, %v727
    %v734 = vunpack.c.l.b16 %v719
    %v735 = vunpack.c.l.b16 %v720
    %v736 = vunpack.c.l.b16 %v721
    %v737 = vunpack.c.l.b16 %v722
    %v738 = vpack.c.b16 %v735, %v734
    %v739 = vpack.c.b16 %v737, %v736
    %v743 = vsel %vm185, %v718, 0
    %745 = vmatprep.subr.bf16.mxu0 0
    %746 = vmatpush1.bf16.msra.mxu0 %v738
    %747 = vmatprep.subr.bf16.mxu0 0
    %748 = vmatpush1.bf16.msra.mxu0 %v739
    %749 = vmatprep.subr.bf16.mxu0 0
    %750 = vmatpush1.bf16.msra.mxu0 0
    %751 = vmatprep.subr.bf16.mxu0 0
    %752 = vmatpush1.bf16.msra.mxu0 0
    %753 = vmatprep.subr.bf16.mxu0 0
    %754 = vmatpush1.bf16.msra.mxu0 0
    %755 = vmatprep.subr.bf16.mxu0 0
    %756 = vmatpush1.bf16.msra.mxu0 0
    %757 = vmatprep.subr.bf16.mxu0 0
    %758 = vmatpush1.bf16.msra.mxu0 0
    %759 = vmatprep.subr.bf16.mxu0 0
    %760 = vmatpush1.bf16.msra.mxu0 0
    %761 = vmatprep.subr.bf16.mxu0 0
    %762 = vmatpush1.bf16.msra.mxu0 0
    %763 = vmatprep.subr.bf16.mxu0 0
    %764 = vmatpush1.bf16.msra.mxu0 0
    %765 = vmatprep.subr.bf16.mxu0 0
    %766 = vmatpush1.bf16.msra.mxu0 0
    %767 = vmatprep.subr.bf16.mxu0 0
    %768 = vmatpush1.bf16.msra.mxu0 0
    %769 = vmatprep.subr.bf16.mxu0 0
    %770 = vmatpush1.bf16.msra.mxu0 0
    %771 = vmatprep.subr.bf16.mxu0 0
    %772 = vmatpush1.bf16.msra.mxu0 0
    %773 = vmatprep.subr.bf16.mxu0 0
    %774 = vmatpush1.bf16.msra.mxu0 0
    %775 = vmatprep.subr.bf16.mxu0 0
    %776 = vmatpush1.bf16.msra.mxu0 0
    %777 = vmatprep.mubr.bf16.mxu0 0
    %778 = vmatmul.mubr.bf16.gmra.mrb[0].mxu0 %v743
    %v779 = vpop.f32.mrb[0].mxu0
    %v780 = vadd.f32 %v728, %v779
    %v781 = vpop.f32.mrb[0].mxu0
    %v782 = vpop.f32.mrb[0].mxu0
    %v783 = vadd.f32 %v728, %v782
    %v784 = vpop.f32.mrb[0].mxu0
    %785 = vdwg.mxu0
    %v786 = vmul.f32 %v780, 0.5
    %v787 = vmul.f32 %v783, 0.5
    %v788 = vmul.f32 %v780, 0.044715
    %v789 = vmul.f32 %v783, 0.044715
    %v790 = vmul.f32 %v788, %v780
    %v791 = vmul.f32 %v789, %v783
    %v792 = vmul.f32 %v790, %v780
    %v793 = vmul.f32 %v791, %v783
    %v794 = vadd.f32 %v780, %v792
    %v795 = vadd.f32 %v783, %v793
    %v796 = vmul.f32 %v794, 0.7978846
    %v797 = vmul.f32 %v795, 0.7978846
    %v798 = vtanh.pop %v796
    %v799 = vtanh.pop %v797
    %v800 = vadd.f32 %v798, 1.0
    %v801 = vadd.f32 %v799, 1.0
    %v802 = vmul.f32 %v786, %v800
    %v803 = vmul.f32 %v787, %v801
    %v804 = vpack.c.bf16 %v803, %v802
    %v805 = vld [vmem:[%s12] sm:$0xf]
    %v806 = vld [vmem:[%s12 + $0x4] sm:$0xf]
    %v807 = vld [vmem:[%s12 + $0x8] sm:$0xf]
    %v808 = vld [vmem:[%s12 + $0xc] sm:$0xf]
    %v809 = vld [vmem:[%s12 + $0x10] sm:$0xf]
    %v810 = vld [vmem:[%s12 + $0x14] sm:$0xf]
    %v811 = vld [vmem:[%s12 + $0x18] sm:$0xf]
    %v812 = vld [vmem:[%s12 + $0x1c] sm:$0xf]
    %v813 = vld [vmem:[#allocation16] sm:$0x1]
    %v815 = vlaneseq
    %v816 = vshrl.u32 %v815, 7
    %v817 = vsub.s32 0, %v816
    %v818 = vrot.slane %v813, %v817
    %v828 = vunpack.c.l.b16 %v805
    %v829 = vunpack.c.l.b16 %v806
    %v830 = vunpack.c.l.b16 %v807
    %v831 = vunpack.c.l.b16 %v808
    %v832 = vunpack.c.l.b16 %v809
    %v833 = vunpack.c.l.b16 %v810
    %v834 = vunpack.c.l.b16 %v811
    %v835 = vunpack.c.l.b16 %v812
    %v836 = vpack.c.b16 %v829, %v828
    %v837 = vpack.c.b16 %v831, %v830
    %v838 = vpack.c.b16 %v833, %v832
    %v839 = vpack.c.b16 %v835, %v834
    %vm844 = vcmask 523264
    %v846 = vsel %vm844, %v804, 0
    %848 = vmatprep.subr.bf16.mxu0 0
    %849 = vmatpush1.bf16.msra.mxu0 %v836
    %850 = vmatprep.subr.bf16.mxu0 0
    %851 = vmatpush1.bf16.msra.mxu0 %v837
    %852 = vmatprep.subr.bf16.mxu0 0
    %853 = vmatpush1.bf16.msra.mxu0 %v838
    %854 = vmatprep.subr.bf16.mxu0 0
    %855 = vmatpush1.bf16.msra.mxu0 %v839
    %856 = vmatprep.subr.bf16.mxu0 0
    %857 = vmatpush1.bf16.msra.mxu0 0
    %858 = vmatprep.subr.bf16.mxu0 0
    %859 = vmatpush1.bf16.msra.mxu0 0
    %860 = vmatprep.subr.bf16.mxu0 0
    %861 = vmatpush1.bf16.msra.mxu0 0
    %862 = vmatprep.subr.bf16.mxu0 0
    %863 = vmatpush1.bf16.msra.mxu0 0
    %864 = vmatprep.subr.bf16.mxu0 0
    %865 = vmatpush1.bf16.msra.mxu0 0
    %866 = vmatprep.subr.bf16.mxu0 0
    %867 = vmatpush1.bf16.msra.mxu0 0
    %868 = vmatprep.subr.bf16.mxu0 0
    %869 = vmatpush1.bf16.msra.mxu0 0
    %870 = vmatprep.subr.bf16.mxu0 0
    %871 = vmatpush1.bf16.msra.mxu0 0
    %872 = vmatprep.subr.bf16.mxu0 0
    %873 = vmatpush1.bf16.msra.mxu0 0
    %874 = vmatprep.subr.bf16.mxu0 0
    %875 = vmatpush1.bf16.msra.mxu0 0
    %876 = vmatprep.subr.bf16.mxu0 0
    %877 = vmatpush1.bf16.msra.mxu0 0
    %878 = vmatprep.subr.bf16.mxu0 0
    %879 = vmatpush1.bf16.msra.mxu0 0
    %880 = vmatprep.mubr.bf16.mxu0 0
    %881 = vmatmul.mubr.bf16.gmra.mrb[0].mxu0 %v846
    %v882 = vpop.f32.mrb[0].mxu0
    %v883 = vadd.f32 %v818, %v882
    %v884 = vpop.f32.mrb[0].mxu0
    %v885 = vpop.f32.mrb[0].mxu0
    %v886 = vadd.f32 %v818, %v885
    %v887 = vpop.f32.mrb[0].mxu0
    %888 = vdwg.mxu0
    %v889 = vadd.f32 %v883, %v716
    %v890 = vadd.f32 %v886, %v717
    %v891 = vld [vmem:[%s14] sm:$0x1]
    %v892 = vld [vmem:[%s15] sm:$0x1]
    %v893 = vsel %vm185, %v889, 0.0
    %894 = vadd.xlane.f32.xlu0 %v893
    %v895 = vpop.xlane.xlu0 %894
    %v896 = vsel %vm185, %v890, 0.0
    %897 = vadd.xlane.f32.xlu0 %v896
    %v898 = vpop.xlane.xlu0 %897
    %v899 = vmul.f32 %v895, %v192
    %v900 = vmul.f32 %v898, %v192
    %v901 = vsub.f32 %v889, %v899
    %v902 = vsub.f32 %v890, %v900
    %v903 = vmul.f32 %v901, %v901
    %v904 = vmul.f32 %v902, %v902
    %v905 = vsel %vm185, %v903, 0.0
    %906 = vadd.xlane.f32.xlu0 %v905
    %v907 = vpop.xlane.xlu0 %906
    %v908 = vsel %vm185, %v904, 0.0
    %909 = vadd.xlane.f32.xlu0 %v908
    %v910 = vpop.xlane.xlu0 %909
    %v911 = vmul.f32 %v907, %v192
    %v912 = vmul.f32 %v910, %v192
    %v913 = vadd.f32 %v911, 1e-12
    %v914 = vadd.f32 %v912, 1e-12
    %v915 = vrsqrt.pop %v913
    %v916 = vrsqrt.pop %v914
    %v917 = vmul.f32 %v901, %v915
    %v918 = vmul.f32 %v902, %v916
    %v920 = vlaneseq
    %v921 = vshrl.u32 %v920, 7
    %v922 = vsub.s32 0, %v921
    %v923 = vrot.slane %v891, %v922
    %v925 = vmul.f32 %v917, %v923
    %v926 = vmul.f32 %v918, %v923
    %v928 = vlaneseq
    %v929 = vshrl.u32 %v928, 7
    %v930 = vsub.s32 0, %v929
    %v931 = vrot.slane %v892, %v930
    %v933 = vadd.f32 %v925, %v931
    %v934 = vadd.f32 %v926, %v931
    %v935 = vpack.c.bf16 %v934, %v933
    %s936 = scalar_lea.vmem %s4, 16
    %v937 = vld [vmem:[%s936] sm:$0xf]
    %v938 = vld [vmem:[%s936 + $0x4] sm:$0xf]
    %v939 = vld [vmem:[%s936 + $0x8] sm:$0xf]
    %v940 = vld [vmem:[%s936 + $0xc] sm:$0xf]
    %s941 = scalar_lea.vmem [#allocation8], 1
    %v942 = vld [vmem:[%s941] sm:$0x1]
    %v944 = vlaneseq
    %v945 = vshrl.u32 %v944, 7
    %v946 = vsub.s32 0, %v945
    %v947 = vrot.slane %v942, %v946
    %v953 = vunpack.c.l.b16 %v937
    %v954 = vunpack.c.l.b16 %v938
    %v955 = vunpack.c.l.b16 %v939
    %v956 = vunpack.c.l.b16 %v940
    %v957 = vpack.c.b16 %v954, %v953
    %v958 = vpack.c.b16 %v956, %v955
    %v962 = vsel %vm185, %v935, 0
    %964 = vmatprep.subr.bf16.mxu0 0
    %965 = vmatpush1.bf16.msra.mxu0 %v957
    %966 = vmatprep.subr.bf16.mxu0 0
    %967 = vmatpush1.bf16.msra.mxu0 %v958
    %968 = vmatprep.subr.bf16.mxu0 0
    %969 = vmatpush1.bf16.msra.mxu0 0
    %970 = vmatprep.subr.bf16.mxu0 0
    %971 = vmatpush1.bf16.msra.mxu0 0
    %972 = vmatprep.subr.bf16.mxu0 0
    %973 = vmatpush1.bf16.msra.mxu0 0
    %974 = vmatprep.subr.bf16.mxu0 0
    %975 = vmatpush1.bf16.msra.mxu0 0
    %976 = vmatprep.subr.bf16.mxu0 0
    %977 = vmatpush1.bf16.msra.mxu0 0
    %978 = vmatprep.subr.bf16.mxu0 0
    %979 = vmatpush1.bf16.msra.mxu0 0
    %980 = vmatprep.subr.bf16.mxu0 0
    %981 = vmatpush1.bf16.msra.mxu0 0
    %982 = vmatprep.subr.bf16.mxu0 0
    %983 = vmatpush1.bf16.msra.mxu0 0
    %984 = vmatprep.subr.bf16.mxu0 0
    %985 = vmatpush1.bf16.msra.mxu0 0
    %986 = vmatprep.subr.bf16.mxu0 0
    %987 = vmatpush1.bf16.msra.mxu0 0
    %988 = vmatprep.subr.bf16.mxu0 0
    %989 = vmatpush1.bf16.msra.mxu0 0
    %990 = vmatprep.subr.bf16.mxu0 0
    %991 = vmatpush1.bf16.msra.mxu0 0
    %992 = vmatprep.subr.bf16.mxu0 0
    %993 = vmatpush1.bf16.msra.mxu0 0
    %994 = vmatprep.subr.bf16.mxu0 0
    %995 = vmatpush1.bf16.msra.mxu0 0
    %996 = vmatprep.mubr.bf16.mxu0 0
    %997 = vmatmul.mubr.bf16.gmra.mrb[0].mxu0 %v962
    %v998 = vpop.f32.mrb[0].mxu0
    %v999 = vadd.f32 %v947, %v998
    %v1000 = vpop.f32.mrb[0].mxu0
    %v1001 = vpop.f32.mrb[0].mxu0
    %v1002 = vadd.f32 %v947, %v1001
    %v1003 = vpop.f32.mrb[0].mxu0
    %1004 = vdwg.mxu0
    %v1005 = vpack.c.bf16 %v1002, %v999
    %v1006 = vmul.f32 %v999, %v237
    %v1007 = vmul.f32 %v1002, %v237
    %v1008 = vmul.f32 %v999, %v242
    %v1009 = vmul.f32 %v1002, %v242
    %v1010 = vmul.f32 %v999, %v247
    %v1011 = vmul.f32 %v1002, %v247
    %v1012 = vmul.f32 %v999, %v252
    %v1013 = vmul.f32 %v1002, %v252
    %v1014 = vpack.c.bf16 %v1007, %v1006
    %v1015 = vpack.c.bf16 %v1009, %v1008
    %v1016 = vpack.c.bf16 %v1011, %v1010
    %v1017 = vpack.c.bf16 %v1013, %v1012
    %1019 = vrot.lane.b32.xlu0 %v1005, 96
    %v1020 = vpop.permute.xlu0 %1019
    %v1022 = vsel %vm185, %v1014, 0
    %v1025 = vsel %vm185, %v1015, 0
    %v1028 = vsel %vm185, %v1016, 0
    %v1031 = vsel %vm185, %v1017, 0
    %v1034 = vsel %vm185, %v1020, 0
    %1036 = vmatprep.subr.bf16.mxu0 0
    %1037 = vmatpush1.bf16.xpose.msra.mxu0 %v1034
    %1038 = vmatprep.subr.bf16.mxu0 0
    %1039 = vmatpush1.bf16.xpose.msra.mxu0 0
    %1040 = vmatprep.subr.bf16.mxu0 0
    %1041 = vmatpush1.bf16.xpose.msra.mxu0 0
    %1042 = vmatprep.subr.bf16.mxu0 0
    %1043 = vmatpush1.bf16.xpose.msra.mxu0 0
    %1044 = vmatprep.subr.bf16.mxu0 0
    %1045 = vmatpush1.bf16.xpose.msra.mxu0 0
    %1046 = vmatprep.subr.bf16.mxu0 0
    %1047 = vmatpush1.bf16.xpose.msra.mxu0 0
    %1048 = vmatprep.subr.bf16.mxu0 0
    %1049 = vmatpush1.bf16.xpose.msra.mxu0 0
    %1050 = vmatprep.subr.bf16.mxu0 0
    %1051 = vmatpush1.bf16.xpose.msra.mxu0 0
    %1052 = vmatprep.subr.bf16.mxu0 0
    %1053 = vmatpush1.bf16.xpose.msra.mxu0 0
    %1054 = vmatprep.subr.bf16.mxu0 0
    %1055 = vmatpush1.bf16.xpose.msra.mxu0 0
    %1056 = vmatprep.subr.bf16.mxu0 0
    %1057 = vmatpush1.bf16.xpose.msra.mxu0 0
    %1058 = vmatprep.subr.bf16.mxu0 0
    %1059 = vmatpush1.bf16.xpose.msra.mxu0 0
    %1060 = vmatprep.subr.bf16.mxu0 0
    %1061 = vmatpush1.bf16.xpose.msra.mxu0 0
    %1062 = vmatprep.subr.bf16.mxu0 0
    %1063 = vmatpush1.bf16.xpose.msra.mxu0 0
    %1064 = vmatprep.subr.bf16.mxu0 0
    %1065 = vmatpush1.bf16.xpose.msra.mxu0 0
    %1066 = vmatprep.subr.bf16.mxu0 0
    %1067 = vmatpush1.bf16.xpose.msra.mxu0 0
    %1068 = vmatprep.mubr.bf16.mxu0 0
    %1069 = vmatmul.mubr.bf16.gmra.mrb[0].mxu0 %v1022
    %v1070 = vpop.f32.mrb[0].mxu0
    %v1071 = vadd.f32 %v229, %v1070
    %v1072 = vpop.f32.mrb[0].mxu0
    %v1073 = vpop.f32.mrb[0].mxu0
    %v1074 = vadd.f32 %v230, %v1073
    %v1075 = vpop.f32.mrb[0].mxu0
    %1076 = vmatprep.mubr.bf16.mxu0 0
    %1077 = vmatmul.mubr.bf16.gmra.mrb[0].mxu0 %v1025
    %v1078 = vpop.f32.mrb[0].mxu0
    %v1079 = vadd.f32 %v229, %v1078
    %v1080 = vpop.f32.mrb[0].mxu0
    %v1081 = vpop.f32.mrb[0].mxu0
    %v1082 = vadd.f32 %v230, %v1081
    %v1083 = vpop.f32.mrb[0].mxu0
    %1084 = vmatprep.mubr.bf16.mxu0 0
    %1085 = vmatmul.mubr.bf16.gmra.mrb[0].mxu0 %v1028
    %v1086 = vpop.f32.mrb[0].mxu0
    %v1087 = vadd.f32 %v229, %v1086
    %v1088 = vpop.f32.mrb[0].mxu0
    %v1089 = vpop.f32.mrb[0].mxu0
    %v1090 = vadd.f32 %v230, %v1089
    %v1091 = vpop.f32.mrb[0].mxu0
    %1092 = vmatprep.mubr.bf16.mxu0 0
    %1093 = vmatmul.mubr.bf16.gmra.mrb[0].mxu0 %v1031
    %v1094 = vpop.f32.mrb[0].mxu0
    %v1095 = vadd.f32 %v229, %v1094
    %v1096 = vpop.f32.mrb[0].mxu0
    %v1097 = vpop.f32.mrb[0].mxu0
    %v1098 = vadd.f32 %v230, %v1097
    %v1099 = vpop.f32.mrb[0].mxu0
    %1100 = vdwg.mxu0
    %v1101 = vsel %vm417, %v1071, -inf
    %1102 = vmax.xlane.f32.xlu0 %v1101
    %v1103 = vpop.xlane.xlu0 %1102
    %v1104 = vsel %vm417, %v1074, -inf
    %1105 = vmax.xlane.f32.xlu0 %v1104
    %v1106 = vpop.xlane.xlu0 %1105
    %v1107 = vsel %vm417, %v1079, -inf
    %1108 = vmax.xlane.f32.xlu0 %v1107
    %v1109 = vpop.xlane.xlu0 %1108
    %v1110 = vsel %vm417, %v1082, -inf
    %1111 = vmax.xlane.f32.xlu0 %v1110
    %v1112 = vpop.xlane.xlu0 %1111
    %v1113 = vsel %vm417, %v1087, -inf
    %1114 = vmax.xlane.f32.xlu0 %v1113
    %v1115 = vpop.xlane.xlu0 %1114
    %v1116 = vsel %vm417, %v1090, -inf
    %1117 = vmax.xlane.f32.xlu0 %v1116
    %v1118 = vpop.xlane.xlu0 %1117
    %v1119 = vsel %vm417, %v1095, -inf
    %1120 = vmax.xlane.f32.xlu0 %v1119
    %v1121 = vpop.xlane.xlu0 %1120
    %v1122 = vsel %vm417, %v1098, -inf
    %1123 = vmax.xlane.f32.xlu0 %v1122
    %v1124 = vpop.xlane.xlu0 %1123
    %v1125 = vsub.f32 %v1071, %v1103
    %v1126 = vsub.f32 %v1074, %v1106
    %v1127 = vsub.f32 %v1079, %v1109
    %v1128 = vsub.f32 %v1082, %v1112
    %v1129 = vsub.f32 %v1087, %v1115
    %v1130 = vsub.f32 %v1090, %v1118
    %v1131 = vsub.f32 %v1095, %v1121
    %v1132 = vsub.f32 %v1098, %v1124
    %v1133 = vmul.f32 %v1125, 1.442695
    %v1134 = vpow.pop %v1133
    %v1135 = vmul.f32 %v1126, 1.442695
    %v1136 = vpow.pop %v1135
    %v1137 = vmul.f32 %v1127, 1.442695
    %v1138 = vpow.pop %v1137
    %v1139 = vmul.f32 %v1128, 1.442695
    %v1140 = vpow.pop %v1139
    %v1141 = vmul.f32 %v1129, 1.442695
    %v1142 = vpow.pop %v1141
    %v1143 = vmul.f32 %v1130, 1.442695
    %v1144 = vpow.pop %v1143
    %v1145 = vmul.f32 %v1131, 1.442695
    %v1146 = vpow.pop %v1145
    %v1147 = vmul.f32 %v1132, 1.442695
    %v1148 = vpow.pop %v1147
    %v1149 = vsel %vm417, %v1134, 0.0
    %1150 = vadd.xlane.f32.xlu0 %v1149
    %v1151 = vpop.xlane.xlu0 %1150
    %v1152 = vsel %vm417, %v1136, 0.0
    %1153 = vadd.xlane.f32.xlu0 %v1152
    %v1154 = vpop.xlane.xlu0 %1153
    %v1155 = vsel %vm417, %v1138, 0.0
    %1156 = vadd.xlane.f32.xlu0 %v1155
    %v1157 = vpop.xlane.xlu0 %1156
    %v1158 = vsel %vm417, %v1140, 0.0
    %1159 = vadd.xlane.f32.xlu0 %v1158
    %v1160 = vpop.xlane.xlu0 %1159
    %v1161 = vsel %vm417, %v1142, 0.0
    %1162 = vadd.xlane.f32.xlu0 %v1161
    %v1163 = vpop.xlane.xlu0 %1162
    %v1164 = vsel %vm417, %v1144, 0.0
    %1165 = vadd.xlane.f32.xlu0 %v1164
    %v1166 = vpop.xlane.xlu0 %1165
    %v1167 = vsel %vm417, %v1146, 0.0
    %1168 = vadd.xlane.f32.xlu0 %v1167
    %v1169 = vpop.xlane.xlu0 %1168
    %v1170 = vsel %vm417, %v1148, 0.0
    %1171 = vadd.xlane.f32.xlu0 %v1170
    %v1172 = vpop.xlane.xlu0 %1171
    %v1173 = vrcp.pop %v1151
    %v1174 = vrcp.pop %v1154
    %v1175 = vrcp.pop %v1157
    %v1176 = vrcp.pop %v1160
    %v1177 = vrcp.pop %v1163
    %v1178 = vrcp.pop %v1166
    %v1179 = vrcp.pop %v1169
    %v1180 = vrcp.pop %v1172
    %v1181 = vmul.f32 %v1134, %v1173
    %v1182 = vmul.f32 %v1136, %v1174
    %v1183 = vmul.f32 %v1138, %v1175
    %v1184 = vmul.f32 %v1140, %v1176
    %v1185 = vmul.f32 %v1142, %v1177
    %v1186 = vmul.f32 %v1144, %v1178
    %v1187 = vmul.f32 %v1146, %v1179
    %v1188 = vmul.f32 %v1148, %v1180
    %v1189 = vpack.c.bf16 %v1182, %v1181
    %v1190 = vpack.c.bf16 %v1184, %v1183
    %v1191 = vpack.c.bf16 %v1186, %v1185
    %v1192 = vpack.c.bf16 %v1188, %v1187
    %1193 = vrot.lane.b32.xlu0 %v1005, 64
    %v1194 = vpop.permute.xlu0 %1193
    %v1197 = vsel %vm417, %v1189, 0
    %v1200 = vsel %vm417, %v1190, 0
    %v1203 = vsel %vm417, %v1191, 0
    %v1206 = vsel %vm417, %v1192, 0
    %1208 = vmatprep.subr.bf16.mxu0 0
    %1209 = vmatpush1.bf16.msra.mxu0 %v1194
    %1210 = vmatprep.subr.bf16.mxu0 0
    %1211 = vmatpush1.bf16.msra.mxu0 0
    %1212 = vmatprep.subr.bf16.mxu0 0
    %1213 = vmatpush1.bf16.msra.mxu0 0
    %1214 = vmatprep.subr.bf16.mxu0 0
    %1215 = vmatpush1.bf16.msra.mxu0 0
    %1216 = vmatprep.subr.bf16.mxu0 0
    %1217 = vmatpush1.bf16.msra.mxu0 0
    %1218 = vmatprep.subr.bf16.mxu0 0
    %1219 = vmatpush1.bf16.msra.mxu0 0
    %1220 = vmatprep.subr.bf16.mxu0 0
    %1221 = vmatpush1.bf16.msra.mxu0 0
    %1222 = vmatprep.subr.bf16.mxu0 0
    %1223 = vmatpush1.bf16.msra.mxu0 0
    %1224 = vmatprep.subr.bf16.mxu0 0
    %1225 = vmatpush1.bf16.msra.mxu0 0
    %1226 = vmatprep.subr.bf16.mxu0 0
    %1227 = vmatpush1.bf16.msra.mxu0 0
    %1228 = vmatprep.subr.bf16.mxu0 0
    %1229 = vmatpush1.bf16.msra.mxu0 0
    %1230 = vmatprep.subr.bf16.mxu0 0
    %1231 = vmatpush1.bf16.msra.mxu0 0
    %1232 = vmatprep.subr.bf16.mxu0 0
    %1233 = vmatpush1.bf16.msra.mxu0 0
    %1234 = vmatprep.subr.bf16.mxu0 0
    %1235 = vmatpush1.bf16.msra.mxu0 0
    %1236 = vmatprep.subr.bf16.mxu0 0
    %1237 = vmatpush1.bf16.msra.mxu0 0
    %1238 = vmatprep.subr.bf16.mxu0 0
    %1239 = vmatpush1.bf16.msra.mxu0 0
    %1240 = vmatprep.mubr.bf16.mxu0 0
    %1241 = vmatmul.mubr.bf16.gmra.mrb[0].mxu0 %v1197
    %v1242 = vpop.f32.mrb[0].mxu0
    %v1243 = vadd.f32 0.0, %v1242
    %v1244 = vpop.f32.mrb[0].mxu0
    %v1245 = vpop.f32.mrb[0].mxu0
    %v1246 = vadd.f32 0.0, %v1245
    %v1247 = vpop.f32.mrb[0].mxu0
    %1248 = vmatprep.mubr.bf16.mxu0 0
    %1249 = vmatmul.mubr.bf16.gmra.mrb[0].mxu0 %v1200
    %v1250 = vpop.f32.mrb[0].mxu0
    %v1251 = vadd.f32 0.0, %v1250
    %v1252 = vpop.f32.mrb[0].mxu0
    %v1253 = vpop.f32.mrb[0].mxu0
    %v1254 = vadd.f32 0.0, %v1253
    %v1255 = vpop.f32.mrb[0].mxu0
    %1256 = vmatprep.mubr.bf16.mxu0 0
    %1257 = vmatmul.mubr.bf16.gmra.mrb[0].mxu0 %v1203
    %v1258 = vpop.f32.mrb[0].mxu0
    %v1259 = vadd.f32 0.0, %v1258
    %v1260 = vpop.f32.mrb[0].mxu0
    %v1261 = vpop.f32.mrb[0].mxu0
    %v1262 = vadd.f32 0.0, %v1261
    %v1263 = vpop.f32.mrb[0].mxu0
    %1264 = vmatprep.mubr.bf16.mxu0 0
    %1265 = vmatmul.mubr.bf16.gmra.mrb[0].mxu0 %v1206
    %v1266 = vpop.f32.mrb[0].mxu0
    %v1267 = vadd.f32 0.0, %v1266
    %v1268 = vpop.f32.mrb[0].mxu0
    %v1269 = vpop.f32.mrb[0].mxu0
    %v1270 = vadd.f32 0.0, %v1269
    %v1271 = vpop.f32.mrb[0].mxu0
    %1272 = vdwg.mxu0
    %v1273 = vmul.f32 %v237, %v1243
    %v1274 = vmul.f32 %v237, %v1246
    %v1275 = vmul.f32 %v242, %v1251
    %v1276 = vmul.f32 %v242, %v1254
    %v1277 = vadd.f32 %v1273, %v1275
    %v1278 = vadd.f32 %v1274, %v1276
    %v1279 = vmul.f32 %v247, %v1259
    %v1280 = vmul.f32 %v247, %v1262
    %v1281 = vadd.f32 %v1277, %v1279
    %v1282 = vadd.f32 %v1278, %v1280
    %v1283 = vmul.f32 %v252, %v1267
    %v1284 = vmul.f32 %v252, %v1270
    %v1285 = vadd.f32 %v1281, %v1283
    %v1286 = vadd.f32 %v1282, %v1284
    %v1287 = vpack.c.bf16 %v1286, %v1285
    %s1288 = scalar_lea.vmem %s6, 16
    %v1289 = vld [vmem:[%s1288] sm:$0xf]
    %v1290 = vld [vmem:[%s1288 + $0x4] sm:$0xf]
    %v1291 = vld [vmem:[%s1288 + $0x8] sm:$0xf]
    %v1292 = vld [vmem:[%s1288 + $0xc] sm:$0xf]
    %s1293 = scalar_lea.vmem [#allocation10], 1
    %v1294 = vld [vmem:[%s1293] sm:$0x1]
    %v1296 = vlaneseq
    %v1297 = vshrl.u32 %v1296, 7
    %v1298 = vsub.s32 0, %v1297
    %v1299 = vrot.slane %v1294, %v1298
    %v1305 = vunpack.c.l.b16 %v1289
    %v1306 = vunpack.c.l.b16 %v1290
    %v1307 = vunpack.c.l.b16 %v1291
    %v1308 = vunpack.c.l.b16 %v1292
    %v1309 = vpack.c.b16 %v1306, %v1305
    %v1310 = vpack.c.b16 %v1308, %v1307
    %v1314 = vsel %vm185, %v1287, 0
    %1316 = vmatprep.subr.bf16.mxu0 0
    %1317 = vmatpush1.bf16.msra.mxu0 %v1309
    %1318 = vmatprep.subr.bf16.mxu0 0
    %1319 = vmatpush1.bf16.msra.mxu0 %v1310
    %1320 = vmatprep.subr.bf16.mxu0 0
    %1321 = vmatpush1.bf16.msra.mxu0 0
    %1322 = vmatprep.subr.bf16.mxu0 0
    %1323 = vmatpush1.bf16.msra.mxu0 0
    %1324 = vmatprep.subr.bf16.mxu0 0
    %1325 = vmatpush1.bf16.msra.mxu0 0
    %1326 = vmatprep.subr.bf16.mxu0 0
    %1327 = vmatpush1.bf16.msra.mxu0 0
    %1328 = vmatprep.subr.bf16.mxu0 0
    %1329 = vmatpush1.bf16.msra.mxu0 0
    %1330 = vmatprep.subr.bf16.mxu0 0
    %1331 = vmatpush1.bf16.msra.mxu0 0
    %1332 = vmatprep.subr.bf16.mxu0 0
    %1333 = vmatpush1.bf16.msra.mxu0 0
    %1334 = vmatprep.subr.bf16.mxu0 0
    %1335 = vmatpush1.bf16.msra.mxu0 0
    %1336 = vmatprep.subr.bf16.mxu0 0
    %1337 = vmatpush1.bf16.msra.mxu0 0
    %1338 = vmatprep.subr.bf16.mxu0 0
    %1339 = vmatpush1.bf16.msra.mxu0 0
    %1340 = vmatprep.subr.bf16.mxu0 0
    %1341 = vmatpush1.bf16.msra.mxu0 0
    %1342 = vmatprep.subr.bf16.mxu0 0
    %1343 = vmatpush1.bf16.msra.mxu0 0
    %1344 = vmatprep.subr.bf16.mxu0 0
    %1345 = vmatpush1.bf16.msra.mxu0 0
    %1346 = vmatprep.subr.bf16.mxu0 0
    %1347 = vmatpush1.bf16.msra.mxu0 0
    %1348 = vmatprep.mubr.bf16.mxu0 0
    %1349 = vmatmul.mubr.bf16.gmra.mrb[0].mxu0 %v1314
    %v1350 = vpop.f32.mrb[0].mxu0
    %v1351 = vadd.f32 %v1299, %v1350
    %v1352 = vpop.f32.mrb[0].mxu0
    %v1353 = vpop.f32.mrb[0].mxu0
    %v1354 = vadd.f32 %v1299, %v1353
    %v1355 = vpop.f32.mrb[0].mxu0
    %1356 = vdwg.mxu0
    %v1357 = vadd.f32 %v1351, %v933
    %v1358 = vadd.f32 %v1354, %v934
    %s1359 = scalar_lea.vmem [#allocation11], 1
    %v1360 = vld [vmem:[%s1359] sm:$0x1]
    %s1361 = scalar_lea.vmem [#allocation13], 1
    %v1362 = vld [vmem:[%s1361] sm:$0x1]
    %v1363 = vsel %vm185, %v1357, 0.0
    %1364 = vadd.xlane.f32.xlu0 %v1363
    %v1365 = vpop.xlane.xlu0 %1364
    %v1366 = vsel %vm185, %v1358, 0.0
    %1367 = vadd.xlane.f32.xlu0 %v1366
    %v1368 = vpop.xlane.xlu0 %1367
    %v1369 = vmul.f32 %v1365, %v192
    %v1370 = vmul.f32 %v1368, %v192
    %v1371 = vsub.f32 %v1357, %v1369
    %v1372 = vsub.f32 %v1358, %v1370
    %v1373 = vmul.f32 %v1371, %v1371
    %v1374 = vmul.f32 %v1372, %v1372
    %v1375 = vsel %vm185, %v1373, 0.0
    %1376 = vadd.xlane.f32.xlu0 %v1375
    %v1377 = vpop.xlane.xlu0 %1376
    %v1378 = vsel %vm185, %v1374, 0.0
    %1379 = vadd.xlane.f32.xlu0 %v1378
    %v1380 = vpop.xlane.xlu0 %1379
    %v1381 = vmul.f32 %v1377, %v192
    %v1382 = vmul.f32 %v1380, %v192
    %v1383 = vadd.f32 %v1381, 1e-12
    %v1384 = vadd.f32 %v1382, 1e-12
    %v1385 = vrsqrt.pop %v1383
    %v1386 = vrsqrt.pop %v1384
    %v1387 = vmul.f32 %v1371, %v1385
    %v1388 = vmul.f32 %v1372, %v1386
    %v1390 = vlaneseq
    %v1391 = vshrl.u32 %v1390, 7
    %v1392 = vsub.s32 0, %v1391
    %v1393 = vrot.slane %v1360, %v1392
    %v1395 = vmul.f32 %v1387, %v1393
    %v1396 = vmul.f32 %v1388, %v1393
    %v1398 = vlaneseq
    %v1399 = vshrl.u32 %v1398, 7
    %v1400 = vsub.s32 0, %v1399
    %v1401 = vrot.slane %v1362, %v1400
    %v1403 = vadd.f32 %v1395, %v1401
    %v1404 = vadd.f32 %v1396, %v1401
    %v1405 = vpack.c.bf16 %v1404, %v1403
    %s1406 = scalar_lea.vmem %s10, 16
    %v1407 = vld [vmem:[%s1406] sm:$0xf]
    %v1408 = vld [vmem:[%s1406 + $0x4] sm:$0xf]
    %v1409 = vld [vmem:[%s1406 + $0x8] sm:$0xf]
    %v1410 = vld [vmem:[%s1406 + $0xc] sm:$0xf]
    %s1411 = scalar_lea.vmem [#allocation14], 1
    %v1412 = vld [vmem:[%s1411] sm:$0x1]
    %v1414 = vlaneseq
    %v1415 = vshrl.u32 %v1414, 7
    %v1416 = vsub.s32 0, %v1415
    %v1417 = vrot.slane %v1412, %v1416
    %v1423 = vunpack.c.l.b16 %v1407
    %v1424 = vunpack.c.l.b16 %v1408
    %v1425 = vunpack.c.l.b16 %v1409
    %v1426 = vunpack.c.l.b16 %v1410
    %v1427 = vpack.c.b16 %v1424, %v1423
    %v1428 = vpack.c.b16 %v1426, %v1425
    %v1432 = vsel %vm185, %v1405, 0
    %1434 = vmatprep.subr.bf16.mxu0 0
    %1435 = vmatpush1.bf16.msra.mxu0 %v1427
    %1436 = vmatprep.subr.bf16.mxu0 0
    %1437 = vmatpush1.bf16.msra.mxu0 %v1428
    %1438 = vmatprep.subr.bf16.mxu0 0
    %1439 = vmatpush1.bf16.msra.mxu0 0
    %1440 = vmatprep.subr.bf16.mxu0 0
    %1441 = vmatpush1.bf16.msra.mxu0 0
    %1442 = vmatprep.subr.bf16.mxu0 0
    %1443 = vmatpush1.bf16.msra.mxu0 0
    %1444 = vmatprep.subr.bf16.mxu0 0
    %1445 = vmatpush1.bf16.msra.mxu0 0
    %1446 = vmatprep.subr.bf16.mxu0 0
    %1447 = vmatpush1.bf16.msra.mxu0 0
    %1448 = vmatprep.subr.bf16.mxu0 0
    %1449 = vmatpush1.bf16.msra.mxu0 0
    %1450 = vmatprep.subr.bf16.mxu0 0
    %1451 = vmatpush1.bf16.msra.mxu0 0
    %1452 = vmatprep.subr.bf16.mxu0 0
    %1453 = vmatpush1.bf16.msra.mxu0 0
    %1454 = vmatprep.subr.bf16.mxu0 0
    %1455 = vmatpush1.bf16.msra.mxu0 0
    %1456 = vmatprep.subr.bf16.mxu0 0
    %1457 = vmatpush1.bf16.msra.mxu0 0
    %1458 = vmatprep.subr.bf16.mxu0 0
    %1459 = vmatpush1.bf16.msra.mxu0 0
    %1460 = vmatprep.subr.bf16.mxu0 0
    %1461 = vmatpush1.bf16.msra.mxu0 0
    %1462 = vmatprep.subr.bf16.mxu0 0
    %1463 = vmatpush1.bf16.msra.mxu0 0
    %1464 = vmatprep.subr.bf16.mxu0 0
    %1465 = vmatpush1.bf16.msra.mxu0 0
    %1466 = vmatprep.mubr.bf16.mxu0 0
    %1467 = vmatmul.mubr.bf16.gmra.mrb[0].mxu0 %v1432
    %v1468 = vpop.f32.mrb[0].mxu0
    %v1469 = vadd.f32 %v1417, %v1468
    %v1470 = vpop.f32.mrb[0].mxu0
    %v1471 = vpop.f32.mrb[0].mxu0
    %v1472 = vadd.f32 %v1417, %v1471
    %v1473 = vpop.f32.mrb[0].mxu0
    %1474 = vdwg.mxu0
    %v1475 = vmul.f32 %v1469, 0.5
    %v1476 = vmul.f32 %v1472, 0.5
    %v1477 = vmul.f32 %v1469, 0.044715
    %v1478 = vmul.f32 %v1472, 0.044715
    %v1479 = vmul.f32 %v1477, %v1469
    %v1480 = vmul.f32 %v1478, %v1472
    %v1481 = vmul.f32 %v1479, %v1469
    %v1482 = vmul.f32 %v1480, %v1472
    %v1483 = vadd.f32 %v1469, %v1481
    %v1484 = vadd.f32 %v1472, %v1482
    %v1485 = vmul.f32 %v1483, 0.7978846
    %v1486 = vmul.f32 %v1484, 0.7978846
    %v1487 = vtanh.pop %v1485
    %v1488 = vtanh.pop %v1486
    %v1489 = vadd.f32 %v1487, 1.0
    %v1490 = vadd.f32 %v1488, 1.0
    %v1491 = vmul.f32 %v1475, %v1489
    %v1492 = vmul.f32 %v1476, %v1490
    %v1493 = vpack.c.bf16 %v1492, %v1491
    %s1494 = scalar_lea.vmem %s12, 32
    %v1495 = vld [vmem:[%s1494] sm:$0xf]
    %v1496 = vld [vmem:[%s1494 + $0x4] sm:$0xf]
    %v1497 = vld [vmem:[%s1494 + $0x8] sm:$0xf]
    %v1498 = vld [vmem:[%s1494 + $0xc] sm:$0xf]
    %v1499 = vld [vmem:[%s1494 + $0x10] sm:$0xf]
    %v1500 = vld [vmem:[%s1494 + $0x14] sm:$0xf]
    %v1501 = vld [vmem:[%s1494 + $0x18] sm:$0xf]
    %v1502 = vld [vmem:[%s1494 + $0x1c] sm:$0xf]
    %s1503 = scalar_lea.vmem [#allocation16], 1
    %v1504 = vld [vmem:[%s1503] sm:$0x1]
    %v1506 = vlaneseq
    %v1507 = vshrl.u32 %v1506, 7
    %v1508 = vsub.s32 0, %v1507
    %v1509 = vrot.slane %v1504, %v1508
    %v1519 = vunpack.c.l.b16 %v1495
    %v1520 = vunpack.c.l.b16 %v1496
    %v1521 = vunpack.c.l.b16 %v1497
    %v1522 = vunpack.c.l.b16 %v1498
    %v1523 = vunpack.c.l.b16 %v1499
    %v1524 = vunpack.c.l.b16 %v1500
    %v1525 = vunpack.c.l.b16 %v1501
    %v1526 = vunpack.c.l.b16 %v1502
    %v1527 = vpack.c.b16 %v1520, %v1519
    %v1528 = vpack.c.b16 %v1522, %v1521
    %v1529 = vpack.c.b16 %v1524, %v1523
    %v1530 = vpack.c.b16 %v1526, %v1525
    %v1536 = vsel %vm844, %v1493, 0
    %1538 = vmatprep.subr.bf16.mxu0 0
    %1539 = vmatpush1.bf16.msra.mxu0 %v1527
    %1540 = vmatprep.subr.bf16.mxu0 0
    %1541 = vmatpush1.bf16.msra.mxu0 %v1528
    %1542 = vmatprep.subr.bf16.mxu0 0
    %1543 = vmatpush1.bf16.msra.mxu0 %v1529
    %1544 = vmatprep.subr.bf16.mxu0 0
    %1545 = vmatpush1.bf16.msra.mxu0 %v1530
    %1546 = vmatprep.subr.bf16.mxu0 0
    %1547 = vmatpush1.bf16.msra.mxu0 0
    %1548 = vmatprep.subr.bf16.mxu0 0
    %1549 = vmatpush1.bf16.msra.mxu0 0
    %1550 = vmatprep.subr.bf16.mxu0 0
    %1551 = vmatpush1.bf16.msra.mxu0 0
    %1552 = vmatprep.subr.bf16.mxu0 0
    %1553 = vmatpush1.bf16.msra.mxu0 0
    %1554 = vmatprep.subr.bf16.mxu0 0
    %1555 = vmatpush1.bf16.msra.mxu0 0
    %1556 = vmatprep.subr.bf16.mxu0 0
    %1557 = vmatpush1.bf16.msra.mxu0 0
    %1558 = vmatprep.subr.bf16.mxu0 0
    %1559 = vmatpush1.bf16.msra.mxu0 0
    %1560 = vmatprep.subr.bf16.mxu0 0
    %1561 = vmatpush1.bf16.msra.mxu0 0
    %1562 = vmatprep.subr.bf16.mxu0 0
    %1563 = vmatpush1.bf16.msra.mxu0 0
    %1564 = vmatprep.subr.bf16.mxu0 0
    %1565 = vmatpush1.bf16.msra.mxu0 0
    %1566 = vmatprep.subr.bf16.mxu0 0
    %1567 = vmatpush1.bf16.msra.mxu0 0
    %1568 = vmatprep.subr.bf16.mxu0 0
    %1569 = vmatpush1.bf16.msra.mxu0 0
    %1570 = vmatprep.mubr.bf16.mxu0 0
    %1571 = vmatmul.mubr.bf16.gmra.mrb[0].mxu0 %v1536
    %v1572 = vpop.f32.mrb[0].mxu0
    %v1573 = vadd.f32 %v1509, %v1572
    %v1574 = vpop.f32.mrb[0].mxu0
    %v1575 = vpop.f32.mrb[0].mxu0
    %v1576 = vadd.f32 %v1509, %v1575
    %v1577 = vpop.f32.mrb[0].mxu0
    %1578 = vdwg.mxu0
    %v1579 = vadd.f32 %v1573, %v1403
    %v1580 = vadd.f32 %v1576, %v1404
    %s1581 = scalar_lea.vmem %s14, 1
    %v1582 = vld [vmem:[%s1581] sm:$0x1]
    %s1583 = scalar_lea.vmem %s15, 1
    %v1584 = vld [vmem:[%s1583] sm:$0x1]
    %v1585 = vsel %vm185, %v1579, 0.0
    %1586 = vadd.xlane.f32.xlu0 %v1585
    %v1587 = vpop.xlane.xlu0 %1586
    %v1588 = vsel %vm185, %v1580, 0.0
    %1589 = vadd.xlane.f32.xlu0 %v1588
    %v1590 = vpop.xlane.xlu0 %1589
    %v1591 = vmul.f32 %v1587, %v192
    %v1592 = vmul.f32 %v1590, %v192
    %v1593 = vsub.f32 %v1579, %v1591
    %v1594 = vsub.f32 %v1580, %v1592
    %v1595 = vmul.f32 %v1593, %v1593
    %v1596 = vmul.f32 %v1594, %v1594
    %v1597 = vsel %vm185, %v1595, 0.0
    %1598 = vadd.xlane.f32.xlu0 %v1597
    %v1599 = vpop.xlane.xlu0 %1598
    %v1600 = vsel %vm185, %v1596, 0.0
    %1601 = vadd.xlane.f32.xlu0 %v1600
    %v1602 = vpop.xlane.xlu0 %1601
    %v1603 = vmul.f32 %v1599, %v192
    %v1604 = vmul.f32 %v1602, %v192
    %v1605 = vadd.f32 %v1603, 1e-12
    %v1606 = vadd.f32 %v1604, 1e-12
    %v1607 = vrsqrt.pop %v1605
    %v1608 = vrsqrt.pop %v1606
    %v1609 = vmul.f32 %v1593, %v1607
    %v1610 = vmul.f32 %v1594, %v1608
    %v1612 = vlaneseq
    %v1613 = vshrl.u32 %v1612, 7
    %v1614 = vsub.s32 0, %v1613
    %v1615 = vrot.slane %v1582, %v1614
    %v1617 = vmul.f32 %v1609, %v1615
    %v1618 = vmul.f32 %v1610, %v1615
    %v1620 = vlaneseq
    %v1621 = vshrl.u32 %v1620, 7
    %v1622 = vsub.s32 0, %v1621
    %v1623 = vrot.slane %v1584, %v1622
    %v1625 = vadd.f32 %v1617, %v1623
    %v1626 = vadd.f32 %v1618, %v1623
    %v1627 = vpack.c.bf16 %v1626, %v1625
    %v1628 = vld [vmem:[%s16] sm:$0xf]
    %v1629 = vld [vmem:[%s16 + $0x4] sm:$0xf]
    %v1630 = vld [vmem:[%s16 + $0x8] sm:$0xf]
    %v1631 = vld [vmem:[%s16 + $0xc] sm:$0xf]
    %v1632 = vld [vmem:[%s17] sm:$0x1]
    %v1634 = vlaneseq
    %v1635 = vshrl.u32 %v1634, 7
    %v1636 = vsub.s32 0, %v1635
    %v1637 = vrot.slane %v1632, %v1636
    %v1643 = vunpack.c.l.b16 %v1628
    %v1644 = vunpack.c.l.b16 %v1629
    %v1645 = vunpack.c.l.b16 %v1630
    %v1646 = vunpack.c.l.b16 %v1631
    %v1647 = vpack.c.b16 %v1644, %v1643
    %v1648 = vpack.c.b16 %v1646, %v1645
    %v1652 = vsel %vm185, %v1627, 0
    %1654 = vmatprep.subr.bf16.mxu0 0
    %1655 = vmatpush1.bf16.msra.mxu0 %v1647
    %1656 = vmatprep.subr.bf16.mxu0 0
    %1657 = vmatpush1.bf16.msra.mxu0 %v1648
    %1658 = vmatprep.subr.bf16.mxu0 0
    %1659 = vmatpush1.bf16.msra.mxu0 0
    %1660 = vmatprep.subr.bf16.mxu0 0
    %1661 = vmatpush1.bf16.msra.mxu0 0
    %1662 = vmatprep.subr.bf16.mxu0 0
    %1663 = vmatpush1.bf16.msra.mxu0 0
    %1664 = vmatprep.subr.bf16.mxu0 0
    %1665 = vmatpush1.bf16.msra.mxu0 0
    %1666 = vmatprep.subr.bf16.mxu0 0
    %1667 = vmatpush1.bf16.msra.mxu0 0
    %1668 = vmatprep.subr.bf16.mxu0 0
    %1669 = vmatpush1.bf16.msra.mxu0 0
    %1670 = vmatprep.subr.bf16.mxu0 0
    %1671 = vmatpush1.bf16.msra.mxu0 0
    %1672 = vmatprep.subr.bf16.mxu0 0
    %1673 = vmatpush1.bf16.msra.mxu0 0
    %1674 = vmatprep.subr.bf16.mxu0 0
    %1675 = vmatpush1.bf16.msra.mxu0 0
    %1676 = vmatprep.subr.bf16.mxu0 0
    %1677 = vmatpush1.bf16.msra.mxu0 0
    %1678 = vmatprep.subr.bf16.mxu0 0
    %1679 = vmatpush1.bf16.msra.mxu0 0
    %1680 = vmatprep.subr.bf16.mxu0 0
    %1681 = vmatpush1.bf16.msra.mxu0 0
    %1682 = vmatprep.subr.bf16.mxu0 0
    %1683 = vmatpush1.bf16.msra.mxu0 0
    %1684 = vmatprep.subr.bf16.mxu0 0
    %1685 = vmatpush1.bf16.msra.mxu0 0
    %1686 = vmatprep.mubr.bf16.mxu0 0
    %1687 = vmatmul.mubr.bf16.gmra.mrb[0].mxu0 %v1652
    %v1688 = vpop.f32.mrb[0].mxu0
    %v1689 = vadd.f32 %v1637, %v1688
    %v1690 = vpop.f32.mrb[0].mxu0
    %v1691 = vpop.f32.mrb[0].mxu0
    %v1692 = vadd.f32 %v1637, %v1691
    %v1693 = vpop.f32.mrb[0].mxu0
    %1694 = vdwg.mxu0
    %1695 = vst [vmem:[#allocation17] sm:$0xff] %v1689
    %1696 = vst [vmem:[#allocation17 + $0x8] sm:$0xff] %v1692
    // Predicated region
    $region110: #{tpu_custom_call.1} parent=1 // pred_check
      _
    $region111: #{tpu_custom_call.1} parent=1 // pred_check_branch
      %1698 = sbr.rel (0) target = $region113
    $region112: #{tpu_custom_call.1} parent=1 // pred_region
      %s1700 = ssub.s32 256, 256
      %1701 = vsyncadd [#allocation4], %s1700
      %s1702 = sshll.u32 [#allocation17], 4
      %s1703 = int_to_ptr.vmem [resolvable:$true] %s1702
      %1708 = dma.vmem_to_hbm [thread:$0]  %s1703, 256, %s18, [#allocation4], 128, 128, 8
    $region113: #{tpu_custom_call.1} parent=1 // pred_fallthru
      _
    // Predicated region
    $region114: #{tpu_custom_call.1} parent=1 // pred_check
      _
    $region115: #{tpu_custom_call.1} parent=1 // pred_check_branch
      %1710 = sbr.rel (0) target = $region117
    $region116: #{tpu_custom_call.1} parent=1 // pred_region
      %1711 = dma.done [#allocation4], 256
    $region117: #{tpu_custom_call.1} parent=1 // pred_fallthru
      _
    %1712 = vsyncpa [#allocation3], 1
    %1713 = vsyncpa [#allocation6], 1
    %1714 = vsyncpa [#allocation9], 1
    %1715 = vsyncpa [#allocation12], 1
    %1716 = vsyncpa [#allocation15], 1
    %1717 = vsyncpa [#allocation4], 1

</llo_original>
